<compile_context>
chip_gen: v7x
topology: tpu7x:2x2x1
jax: 0.10.0
libtpu: 0.0.40
codegen_flags: <defaults>
</compile_context>

<pallas_src>
import jax
import jax.numpy as jnp
import numpy as np
from jax.experimental import pallas as pl
from jax.experimental.pallas import tpu as pltpu


def _vmem_bytes(tile_m, K, D):
    """Rough per-step VMEM footprint (double-buffered IO + live intermediates)."""
    io = 2 * (tile_m * D * 4        # x in  (f32)
              + tile_m * D * 4      # quantized out (f32)
              + tile_m * K * 2      # one-hot out (bf16)
              + 2 * K * 4)          # merged partials out (f32)
    resident = 2 * (K * D * 4 + K * 4)   # codebook + 0.5*||e||^2 (double-buffered)
    live = 2 * tile_m * K * 4            # (TM,K) f32 score + one-hot intermediates
    return io + resident + live


def _choose_tile_m(M, K, D, max_tile=2048, budget_bytes=24 << 20):
    """Largest power-of-two tile that divides M, fits the VMEM budget (safe even on
    v7x's 64 MiB physical / 32 MiB scoped VMEM) and keeps grid_m >= 2 so both v7x
    TensorCores get work."""
    best = None
    t = 8
    while t <= min(max_tile, M):
        if M % t == 0 and _vmem_bytes(t, K, D) <= budget_bytes:
            if M // t >= 2 or best is None:
                best = t
        t *= 2
    return best if best is not None else M


def vq_kernel(x_ref, e_ref, esq_ref, q_ref, enc_ref, part_ref):
    # x_ref: (TM, D) tile of flattened inputs; e_ref: (K, D) codebook (resident);
    # esq_ref: (1, K) precomputed 0.5*||e_k||^2 (resident).
    x = x_ref[...].astype(jnp.float32)                       # (TM, D)
    e = e_ref[...].astype(jnp.float32)                       # (K, D)
    num_codes = e.shape[0]

    # ---- nearest-code score: 0.5*||e_k||^2 - x.e_k  (same argmin as full L2 dist;
    #      ||x||^2 is row-constant so it is dropped and the factor of 2 folded).
    xe = jax.lax.dot_general(                                 # (TM, K) = x @ e^T (MXU)
        x, e, (((1,), (1,)), ((), ())),
        preferred_element_type=jnp.float32)
    score = esq_ref[...] - xe                                 # (1,K) broadcasts

    # ---- argmin over codes (first index on ties, like torch.argmin) -> one-hot
    # TODO(synk): for K >= 512, switch to a single-pass packed (value|index) reduce
    # to halve the XLU traffic over the (TM, K) slab.
    iota = jax.lax.broadcasted_iota(jnp.int32, score.shape, 1)
    min_s = jnp.min(score, axis=1, keepdims=True)
    idx = jnp.min(jnp.where(score <= min_s, iota, num_codes),
                  axis=1, keepdims=True)                      # (TM, 1)
    enc = (iota == idx).astype(jnp.float32)                   # (TM, K) one-hot (VMEM only)

    # ---- codebook lookup as one-hot matmul (MXU, f32 -> exact codebook rows)
    q = jnp.dot(enc, e, preferred_element_type=jnp.float32)   # (TM, D)

    # TODO(synk): lane-densify the q store ((TM,32)->(TM/4,128) reshape) once the
    # in-kernel relayout cost is verified via a bundle dump.
    q_ref[...] = q.astype(q_ref.dtype)
    enc_ref[...] = enc.astype(enc_ref.dtype)                  # bf16 halves dominant HBM write

    # ---- merged per-tile partials: row 0 = code counts, row 1 = sum of sq error
    diff = q - x
    counts = jnp.sum(enc, axis=0, keepdims=True)              # (1, K)
    sq_row = jnp.broadcast_to(jnp.sum(diff * diff), counts.shape)
    part_ref[...] = jnp.concatenate([counts, sq_row], axis=0)[None]   # (1, 2, K)


def vector_quantize(x_nchw, embedding, commitment_cost, *, max_tile_m=2048):
    """x_nchw: (N, C, H, W); embedding: (K, D) with D == C.

    Returns (loss, quantized_nchw, perplexity, encodings) matching the PyTorch
    VectorQuantizer.forward values.
    """
    N, C, H, W = x_nchw.shape
    K, D = embedding.shape
    assert C == D, "channel dim must equal embedding_dim"
    M = N * H * W

    tile_m = _choose_tile_m(M, K, D, max_tile=max_tile_m)
    # TODO(synk): production shapes would pad M to a tile multiple and mask the tail
    # (padded rows must be excluded from the sq-error / count partials).
    assert M % tile_m == 0, "toy wrapper assumes M divisible by tile_m"
    grid_m = M // tile_m

    est = _vmem_bytes(tile_m, K, D)
    vmem_limit = None if est <= (28 << 20) else min(64 << 20, int(est * 1.25))

    # Lane-dense flat layout: (M, D), rows ordered as NHWC (same as torch's .view).
    x_flat = jnp.transpose(x_nchw, (0, 2, 3, 1)).reshape(M, D)
    # Hoisted codebook half-norms, computed once outside the grid.
    half_e_sq = 0.5 * jnp.sum(embedding.astype(jnp.float32) ** 2, axis=1)[None, :]

    quantized_flat, encodings_bf16, part = pl.pallas_call(
        vq_kernel,
        out_shape=(
            jax.ShapeDtypeStruct((M, D), x_nchw.dtype),          # quantized (flat)
            jax.ShapeDtypeStruct((M, K), jnp.bfloat16),          # one-hot encodings
            jax.ShapeDtypeStruct((grid_m, 2, K), jnp.float32),   # merged partials
        ),
        grid_spec=pltpu.PrefetchScalarGridSpec(
            num_scalar_prefetch=0,
            grid=(grid_m,),
            in_specs=[
                pl.BlockSpec((tile_m, D), lambda i: (i, 0)),
                pl.BlockSpec((K, D), lambda i: (0, 0)),          # codebook, resident
                pl.BlockSpec((1, K), lambda i: (0, 0)),          # 0.5*||e||^2, resident
            ],
            out_specs=[
                pl.BlockSpec((tile_m, D), lambda i: (i, 0)),
                pl.BlockSpec((tile_m, K), lambda i: (i, 0)),
                pl.BlockSpec((1, 2, K), lambda i: (i, 0, 0)),
            ],
        ),
        compiler_params=pltpu.CompilerParams(
            dimension_semantics=("parallel",),
            vmem_limit_bytes=vmem_limit),
    )(x_flat, embedding, half_e_sq)

    # ---- tiny epilogue: finalize loss / perplexity from per-tile partials
    mse = jnp.sum(part[:, 1, 0]) / jnp.float32(M * D)
    loss = (1.0 + commitment_cost) * mse                       # q_loss + cc * e_loss
    avg_probs = jnp.sum(part[:, 0, :], axis=0) / jnp.float32(M)
    perplexity = jnp.exp(-jnp.sum(avg_probs * jnp.log(avg_probs + 1e-10)))

    encodings = encodings_bf16.astype(jnp.float32)             # 0/1 exact in bf16
    quantized = jnp.transpose(quantized_flat.reshape(N, H, W, D), (0, 3, 1, 2))
    return loss, quantized, perplexity, encodings


def reference(x_nchw, embedding, commitment_cost):
    """Pure-JAX reference of VectorQuantizer.forward (forward values only)."""
    N, C, H, W = x_nchw.shape
    K, D = embedding.shape
    inputs = jnp.transpose(x_nchw, (0, 2, 3, 1))
    flat = inputs.reshape(-1, D)
    dist = (jnp.sum(flat ** 2, axis=1, keepdims=True)
            + jnp.sum(embedding ** 2, axis=1)
            - 2.0 * flat @ embedding.T)
    idx = jnp.argmin(dist, axis=1)
    enc = jax.nn.one_hot(idx, K, dtype=jnp.float32)
    q = (enc @ embedding).reshape(inputs.shape)
    mse = jnp.mean((q - inputs) ** 2)
    loss = (1.0 + commitment_cost) * mse
    avg = jnp.mean(enc, axis=0)
    perplexity = jnp.exp(-jnp.sum(avg * jnp.log(avg + 1e-10)))
    return loss, jnp.transpose(q, (0, 3, 1, 2)), perplexity, enc


if __name__ == "__main__":
    key = jax.random.PRNGKey(0)
    kx, ke = jax.random.split(key)

    # Small, module-consistent shapes: embedding_dim (hidden) = 32, spatial = 16,
    # batch = 2, num_embeddings = 128 (lane-dense codebook axis).
    N, D, H, W = 2, 32, 16, 16
    num_embeddings = 128
    commitment_cost = 0.25

    x = jax.random.normal(kx, (N, D, H, W), dtype=jnp.float32)
    # nn.Embedding weight init: uniform(-1/num_embeddings, 1/num_embeddings)
    embedding = jax.random.uniform(
        ke, (num_embeddings, D), jnp.float32,
        -1.0 / num_embeddings, 1.0 / num_embeddings)

    loss, quantized, perplexity, encodings = vector_quantize(
        x, embedding, commitment_cost)
    jax.block_until_ready((loss, quantized, perplexity, encodings))

    rloss, rq, rperp, renc = reference(x, embedding, commitment_cost)
    np.testing.assert_allclose(np.asarray(quantized), np.asarray(rq),
                               atol=1e-5, rtol=1e-5)
    np.testing.assert_allclose(np.asarray(encodings), np.asarray(renc),
                               atol=0, rtol=0)
    np.testing.assert_allclose(np.asarray(loss), np.asarray(rloss),
                               atol=1e-6, rtol=1e-5)
    np.testing.assert_allclose(np.asarray(perplexity), np.asarray(rperp),
                               atol=1e-4, rtol=1e-5)

    print("KERNEL_OK")
</pallas_src>

<mosaic_0001>
module attributes {stable_mosaic.version = 11 : i64} {
  func.func @vq_kernel(%arg0: i32, %arg1: memref<256x32xf32, #tpu.memory_space<vmem>>, %arg2: memref<128x32xf32, #tpu.memory_space<vmem>>, %arg3: memref<1x128xf32, #tpu.memory_space<vmem>>, %arg4: memref<256x32xf32, #tpu.memory_space<vmem>>, %arg5: memref<256x128xbf16, #tpu.memory_space<vmem>>, %arg6: memref<1x2x128xf32, #tpu.memory_space<vmem>>) attributes {dimension_semantics = [#tpu.dimension_semantics<parallel>], iteration_bounds = array<i64: 2>, scalar_prefetch = 0 : i64, scratch_operands = 0 : i64, tpu.core_type = #tpu.core_type<tc>, window_params = [{transform_indices = @transform_0, window_bounds = array<i64: 256, 32>}, {pipeline_mode = #tpu.pipeline_mode<synchronous>, transform_indices = @transform_1, window_bounds = array<i64: 128, 32>}, {pipeline_mode = #tpu.pipeline_mode<synchronous>, transform_indices = @transform_2, window_bounds = array<i64: 1, 128>}, {transform_indices = @transform_3, window_bounds = array<i64: 256, 32>}, {transform_indices = @transform_4, window_bounds = array<i64: 256, 128>}, {transform_indices = @transform_5, window_bounds = array<i64: 1, 2, 128>}]} {
    %c0 = arith.constant 0 : index
    %c0_0 = arith.constant 0 : index
    %0 = vector.load %arg1[%c0, %c0_0] : memref<256x32xf32, #tpu.memory_space<vmem>>, vector<256x32xf32>
    %c0_1 = arith.constant 0 : index
    %c0_2 = arith.constant 0 : index
    %1 = vector.load %arg2[%c0_1, %c0_2] : memref<128x32xf32, #tpu.memory_space<vmem>>, vector<128x32xf32>
    %cst = arith.constant dense<0.000000e+00> : vector<256x128xf32>
    %2 = tpu.matmul %0, %1, %cst {dimension_numbers = #tpu.dot_dimension_numbers<[1], [1], [0], [0], [0, 0, 1, 0], [], []>} : vector<256x32xf32>, vector<128x32xf32>, vector<256x128xf32> -> vector<256x128xf32>
    %c0_3 = arith.constant 0 : index
    %c0_4 = arith.constant 0 : index
    %3 = vector.load %arg3[%c0_3, %c0_4] : memref<1x128xf32, #tpu.memory_space<vmem>>, vector<1x128xf32>
    %4 = vector.broadcast %3 : vector<1x128xf32> to vector<256x128xf32>
    %5 = arith.subf %4, %2 : vector<256x128xf32>
    %6 = tpu.iota {dimensions = array<i32: 1>} : vector<256x128xi32>
    %cst_5 = arith.constant dense<0x7F800000> : vector<256xf32>
    %7 = vector.multi_reduction <minimumf>, %5, %cst_5 [1] : vector<256x128xf32> to vector<256xf32>
    %8 = vector.shape_cast %7 : vector<256xf32> to vector<256x1xf32>
    %9 = vector.broadcast %8 : vector<256x1xf32> to vector<256x128xf32>
    %10 = arith.cmpf ole, %5, %9 : vector<256x128xf32>
    %c128_i32 = arith.constant 128 : i32
    %11 = vector.broadcast %c128_i32 : i32 to vector<256x128xi32>
    %12 = arith.select %10, %6, %11 : vector<256x128xi1>, vector<256x128xi32>
    %cst_6 = arith.constant dense<2147483647> : vector<256xi32>
    %13 = vector.multi_reduction <minsi>, %12, %cst_6 [1] : vector<256x128xi32> to vector<256xi32>
    %14 = vector.shape_cast %13 : vector<256xi32> to vector<256x1xi32>
    %15 = vector.broadcast %14 : vector<256x1xi32> to vector<256x128xi32>
    %16 = arith.cmpi eq, %6, %15 : vector<256x128xi32>
    %17 = arith.extui %16 : vector<256x128xi1> to vector<256x128xi32>
    %18 = arith.sitofp %17 : vector<256x128xi32> to vector<256x128xf32>
    %cst_7 = arith.constant dense<0.000000e+00> : vector<256x32xf32>
    %19 = tpu.matmul %18, %1, %cst_7 {dimension_numbers = #tpu.dot_dimension_numbers<[1], [0], [0], [1], [0, 0, 1, 1], [], []>} : vector<256x128xf32>, vector<128x32xf32>, vector<256x32xf32> -> vector<256x32xf32>
    %c0_8 = arith.constant 0 : index
    %c0_9 = arith.constant 0 : index
    %20 = vector.load %arg4[%c0_8, %c0_9] : memref<256x32xf32, #tpu.memory_space<vmem>>, vector<256x32xf32>
    tpu.vector_store %arg4[%c0_8, %c0_9], %19 {strides = array<i32>} : memref<256x32xf32, #tpu.memory_space<vmem>>, vector<256x32xf32>,
    %21 = arith.truncf %18 : vector<256x128xf32> to vector<256x128xbf16>
    %c0_10 = arith.constant 0 : index
    %c0_11 = arith.constant 0 : index
    %22 = vector.load %arg5[%c0_10, %c0_11] : memref<256x128xbf16, #tpu.memory_space<vmem>>, vector<256x128xbf16>
    tpu.vector_store %arg5[%c0_10, %c0_11], %21 {strides = array<i32>} : memref<256x128xbf16, #tpu.memory_space<vmem>>, vector<256x128xbf16>,
    %23 = arith.subf %19, %0 : vector<256x32xf32>
    %cst_12 = arith.constant dense<0.000000e+00> : vector<128xf32>
    %24 = vector.multi_reduction <add>, %18, %cst_12 [0] : vector<256x128xf32> to vector<128xf32>
    %25 = vector.shape_cast %24 : vector<128xf32> to vector<1x128xf32>
    %26 = arith.mulf %23, %23 : vector<256x32xf32>
    %27 = vector.shape_cast %26 : vector<256x32xf32> to vector<1x256x32xf32>
    %cst_13 = arith.constant dense<0.000000e+00> : vector<1xf32>
    %28 = vector.multi_reduction <add>, %27, %cst_13 [1, 2] : vector<1x256x32xf32> to vector<1xf32>
    %29 = vector.shape_cast %28 : vector<1xf32> to vector<1x1x1xf32>
    %30 = vector.extract %29[0, 0, 0] : f32 from vector<1x1x1xf32>
    %31 = vector.broadcast %30 : f32 to vector<1x128xf32>
    %32 = tpu.concatenate %25, %31 in 0 : vector<1x128xf32>, vector<1x128xf32> -> vector<2x128xf32>
    %33 = vector.shape_cast %32 : vector<2x128xf32> to vector<1x2x128xf32>
    %c0_14 = arith.constant 0 : index
    %c0_15 = arith.constant 0 : index
    %c0_16 = arith.constant 0 : index
    %34 = vector.load %arg6[%c0_14, %c0_15, %c0_16] : memref<1x2x128xf32, #tpu.memory_space<vmem>>, vector<1x2x128xf32>
    tpu.vector_store %arg6[%c0_14, %c0_15, %c0_16], %33 {strides = array<i32>} : memref<1x2x128xf32, #tpu.memory_space<vmem>>, vector<1x2x128xf32>,
    return
  }
  func.func @transform_0(%arg0: i32) -> (i32, i32) {
    %c0_i32 = arith.constant 0 : i32
    %c0_i32_0 = arith.constant 0 : i32
    return %arg0, %c0_i32 : i32, i32
  }
  func.func @transform_1(%arg0: i32) -> (i32, i32) {
    %c0_i32 = arith.constant 0 : i32
    %c0_i32_0 = arith.constant 0 : i32
    %c0_i32_1 = arith.constant 0 : i32
    return %c0_i32, %c0_i32_0 : i32, i32
  }
  func.func @transform_2(%arg0: i32) -> (i32, i32) {
    %c0_i32 = arith.constant 0 : i32
    %c0_i32_0 = arith.constant 0 : i32
    %c0_i32_1 = arith.constant 0 : i32
    return %c0_i32, %c0_i32_0 : i32, i32
  }
  func.func @transform_3(%arg0: i32) -> (i32, i32) {
    %c0_i32 = arith.constant 0 : i32
    %c0_i32_0 = arith.constant 0 : i32
    return %arg0, %c0_i32 : i32, i32
  }
  func.func @transform_4(%arg0: i32) -> (i32, i32) {
    %c0_i32 = arith.constant 0 : i32
    %c0_i32_0 = arith.constant 0 : i32
    return %arg0, %c0_i32 : i32, i32
  }
  func.func @transform_5(%arg0: i32) -> (i32, i32, i32) {
    %c0_i32 = arith.constant 0 : i32
    %c0_i32_0 = arith.constant 0 : i32
    %c0_i32_1 = arith.constant 0 : i32
    return %arg0, %c0_i32, %c0_i32_0 : i32, i32, i32
  }
}

</mosaic_0001>

<llo_original>
// kernel: tpu_custom_call.1
$region0: #{tpu_custom_call.1}
  #allocation0 [shape = 'u32[]', space=smem, size = 0x4, offset = 0x4, fixed_abs, tag = 'smem constant byte address 0x4 - core index']
  #allocation1 [shape = 'u32[144,128]{1,0:T(1,128)}', space=vmem, size = 0x12000, scoped, tag = 'internal scratch']
  %s0 = inlined_call_operand.vmem [shape: f32[512,32], index: 0, kind: input, shape index: {}]
  %s1 = inlined_call_operand.vmem [shape: f32[128,32], index: 1, kind: input, shape index: {}]
  %s2 = inlined_call_operand.vmem [shape: f32[1,128], index: 2, kind: input, shape index: {}]
  %s3 = inlined_call_operand.vmem [shape: f32[512,32], index: 3, kind: output, shape index: {0}]
  %s4 = inlined_call_operand.hbm [shape: bf16[512,128], index: 4, kind: output, shape index: {1}]
  %s5 = inlined_call_operand.hbm [shape: f32[2,2,128], index: 5, kind: output, shape index: {2}]
  %6 = xla_tuple %s3, %s4, %s5
  %s7 = sld [smem:[#allocation0]]
  $region61: #{tpu_custom_call.1} parent=0
    _
  %s9 = ssub.s32 1, %s7
  %s10 = scalar_select 0, %s9, %s7
  $region1: #{tpu_custom_call.1} parent=0
    #allocation2 [shape = 'u8[131072]{0}', space=vmem, size = 0x20000, scoped, tag = 'output window, operand 1']
    #allocation3 [shape = 's32[2]{0}', space=sflag, size = 0x8, scoped, tag = 'scoped memory for tpu_custom_call.1']
    #allocation4 [shape = 'u8[2048]{0}', space=vmem, size = 0x800, scoped, tag = 'output window, operand 2']
    #allocation5 [shape = 's32[2]{0}', space=sflag, size = 0x8, scoped, tag = 'scoped memory for tpu_custom_call.1']
    %11 = vsyncpa [#allocation3], 0
    %s12 = scalar_lea.sflag [#allocation3], 1
    %13 = vsyncpa %s12, 0
    %14 = vsyncpa [#allocation5], 0
    %s15 = scalar_lea.sflag [#allocation5], 1
    %16 = vsyncpa %s15, 0
    loop: start=0, step=1, limit=4
    $region2: #{tpu_custom_call.1} parent=1 // loop_pre_header
      _
    $region3: #{tpu_custom_call.1} parent=1 // loop_header
      %s18 = sphi 0, %s22
      %p19 = scmp.ge.s32.totalorder %s18, 4
      %s28 = sphi 0, %s30
      %s31 = sphi 0, %s28
      %s32 = sphi 0, %s31
      %s48 = sphi 0, %s32
      %s52 = sphi 0, %s52
      %s54 = sphi 0, %s52
      %s55 = sphi 0, %s54
      %s69 = sphi 0, %s55
      %s73 = sphi 0, %s73
      %s75 = sphi 0, %s73
      %s76 = sphi 0, %s75
      %s90 = sphi 0, %s76
      %s96 = sphi 0, %s98
      %s99 = sphi 0, %s96
      %s100 = sphi 0, %s99
      %s116 = sphi 0, %s100
      %s122 = sphi 0, %s124
      %s125 = sphi 0, %s122
      %s126 = sphi 0, %s125
      %s142 = sphi 0, %s126
      %s148 = sphi 0, %s150
      %s151 = sphi 0, %s148
      %s152 = sphi 0, %s151
      %s168 = sphi 0, %s152
    $region4: #{tpu_custom_call.1} parent=1 // loop_header_branch
      %21 = sbr.rel (%p19) target = $region8
    $region5: #{tpu_custom_call.1} parent=1 // loop_body
      %s23 = ssub.s32 %s18, 1
      %s24 = ssub.s32 %s18, 2
      %s25 = sadd.s32 %s18, 1
      %s26 = ssub.s32 %s18, %s25
      %p27 = scmp.eq.s32.totalorder %s26, 0
      %s29 = sadd.s32 %s28, 1
      %s30 = scalar_select %p27, %s28, %s29
      %p33 = pneg %p27
      %p34 = scmp.eq.s32.totalorder %s18, 1
      %p35 = por %p33, %p34
      %p36 = scmp.ne.s32.totalorder %s28, %s31
      %p37 = scmp.eq.s32.totalorder %s18, 0
      %p38 = por %p36, %p37
      %p39 = scmp.ne.s32.totalorder %s28, %s31
      %p40 = scmp.eq.s32.totalorder %s23, 1
      %p41 = por %p39, %p40
      %p42 = scmp.ne.s32.totalorder %s31, %s32
      %p43 = scmp.eq.s32.totalorder %s23, 0
      %p44 = por %p42, %p43
      %p45 = scmp.ne.s32.totalorder %s31, %s32
      %p46 = scmp.eq.s32.totalorder %s24, 1
      %p47 = por %p45, %p46
      %p49 = scmp.ne.s32.totalorder %s32, %s48
      %p50 = scmp.eq.s32.totalorder %s24, 0
      %p51 = por %p49, %p50
      %s53 = sadd.s32 %s52, 1
      %p56 = scmp.eq.s32.totalorder %s18, 1
      %p57 = scmp.ne.s32.totalorder %s52, %s54
      %p58 = scmp.eq.s32.totalorder %s18, 0
      %p59 = por %p57, %p58
      %p60 = scmp.ne.s32.totalorder %s52, %s54
      %p61 = scmp.eq.s32.totalorder %s23, 1
      %p62 = por %p60, %p61
      %p63 = scmp.ne.s32.totalorder %s54, %s55
      %p64 = scmp.eq.s32.totalorder %s23, 0
      %p65 = por %p63, %p64
      %p66 = scmp.ne.s32.totalorder %s54, %s55
      %p67 = scmp.eq.s32.totalorder %s24, 1
      %p68 = por %p66, %p67
      %p70 = scmp.ne.s32.totalorder %s55, %s69
      %p71 = scmp.eq.s32.totalorder %s24, 0
      %p72 = por %p70, %p71
      %s74 = sadd.s32 %s73, 1
      %p77 = scmp.eq.s32.totalorder %s18, 1
      %p78 = scmp.ne.s32.totalorder %s73, %s75
      %p79 = scmp.eq.s32.totalorder %s18, 0
      %p80 = por %p78, %p79
      %p81 = scmp.ne.s32.totalorder %s73, %s75
      %p82 = scmp.eq.s32.totalorder %s23, 1
      %p83 = por %p81, %p82
      %p84 = scmp.ne.s32.totalorder %s75, %s76
      %p85 = scmp.eq.s32.totalorder %s23, 0
      %p86 = por %p84, %p85
      %p87 = scmp.ne.s32.totalorder %s75, %s76
      %p88 = scmp.eq.s32.totalorder %s24, 1
      %p89 = por %p87, %p88
      %p91 = scmp.ne.s32.totalorder %s76, %s90
      %p92 = scmp.eq.s32.totalorder %s24, 0
      %p93 = por %p91, %p92
      %s94 = ssub.s32 %s18, %s25
      %p95 = scmp.eq.s32.totalorder %s94, 0
      %s97 = sadd.s32 %s96, 1
      %s98 = scalar_select %p95, %s96, %s97
      %p101 = pneg %p95
      %p102 = scmp.eq.s32.totalorder %s18, 1
      %p103 = por %p101, %p102
      %p104 = scmp.ne.s32.totalorder %s96, %s99
      %p105 = scmp.eq.s32.totalorder %s18, 0
      %p106 = por %p104, %p105
      %p107 = scmp.ne.s32.totalorder %s96, %s99
      %p108 = scmp.eq.s32.totalorder %s23, 1
      %p109 = por %p107, %p108
      %p110 = scmp.ne.s32.totalorder %s99, %s100
      %p111 = scmp.eq.s32.totalorder %s23, 0
      %p112 = por %p110, %p111
      %p113 = scmp.ne.s32.totalorder %s99, %s100
      %p114 = scmp.eq.s32.totalorder %s24, 1
      %p115 = por %p113, %p114
      %p117 = scmp.ne.s32.totalorder %s100, %s116
      %p118 = scmp.eq.s32.totalorder %s24, 0
      %p119 = por %p117, %p118
      %s120 = ssub.s32 %s18, %s25
      %p121 = scmp.eq.s32.totalorder %s120, 0
      %s123 = sadd.s32 %s122, 1
      %s124 = scalar_select %p121, %s122, %s123
      %p127 = pneg %p121
      %p128 = scmp.eq.s32.totalorder %s18, 1
      %p129 = por %p127, %p128
      %p130 = scmp.ne.s32.totalorder %s122, %s125
      %p131 = scmp.eq.s32.totalorder %s18, 0
      %p132 = por %p130, %p131
      %p133 = scmp.ne.s32.totalorder %s122, %s125
      %p134 = scmp.eq.s32.totalorder %s23, 1
      %p135 = por %p133, %p134
      %p136 = scmp.ne.s32.totalorder %s125, %s126
      %p137 = scmp.eq.s32.totalorder %s23, 0
      %p138 = por %p136, %p137
      %p139 = scmp.ne.s32.totalorder %s125, %s126
      %p140 = scmp.eq.s32.totalorder %s24, 1
      %p141 = por %p139, %p140
      %p143 = scmp.ne.s32.totalorder %s126, %s142
      %p144 = scmp.eq.s32.totalorder %s24, 0
      %p145 = por %p143, %p144
      %s146 = ssub.s32 %s18, %s25
      %p147 = scmp.eq.s32.totalorder %s146, 0
      %s149 = sadd.s32 %s148, 1
      %s150 = scalar_select %p147, %s148, %s149
      %p153 = pneg %p147
      %p154 = scmp.eq.s32.totalorder %s18, 1
      %p155 = por %p153, %p154
      %p156 = scmp.ne.s32.totalorder %s148, %s151
      %p157 = scmp.eq.s32.totalorder %s18, 0
      %p158 = por %p156, %p157
      %p159 = scmp.ne.s32.totalorder %s148, %s151
      %p160 = scmp.eq.s32.totalorder %s23, 1
      %p161 = por %p159, %p160
      %p162 = scmp.ne.s32.totalorder %s151, %s152
      %p163 = scmp.eq.s32.totalorder %s23, 0
      %p164 = por %p162, %p163
      %p165 = scmp.ne.s32.totalorder %s151, %s152
      %p166 = scmp.eq.s32.totalorder %s24, 1
      %p167 = por %p165, %p166
      %p169 = scmp.ne.s32.totalorder %s152, %s168
      %p170 = scmp.eq.s32.totalorder %s24, 0
      %p171 = por %p169, %p170
      %p172 = scmp.le.s32.totalorder 1, %s18
      %p173 = scmp.lt.s32.totalorder %s18, 3
      %p174 = pnand %p172, %p173
      %p175 = pneg %p174
      // Predicated region
      $region9: #{tpu_custom_call.1} parent=5 // pred_check
        _
      $region10: #{tpu_custom_call.1} parent=5 // pred_check_branch
        %177 = sbr.rel (%p174) target = $region12
      $region11: #{tpu_custom_call.1} parent=5 // pred_region
        %s178 = ssub.s32 %s18, 1
        // Predicated region
        $region13: #{tpu_custom_call.1} parent=11 // pred_check
          %p179 = pneg %p65
        $region14: #{tpu_custom_call.1} parent=11 // pred_check_branch
          %181 = sbr.rel (%p179) target = $region16
        $region15: #{tpu_custom_call.1} parent=11 // pred_region
          _
        $region16: #{tpu_custom_call.1} parent=11 // pred_fallthru
          _
        // Predicated region
        $region17: #{tpu_custom_call.1} parent=11 // pred_check
          %p182 = pneg %p86
        $region18: #{tpu_custom_call.1} parent=11 // pred_check_branch
          %184 = sbr.rel (%p182) target = $region20
        $region19: #{tpu_custom_call.1} parent=11 // pred_region
          _
        $region20: #{tpu_custom_call.1} parent=11 // pred_fallthru
          _
      $region12: #{tpu_custom_call.1} parent=5 // pred_fallthru
        _
      %p185 = scmp.lt.s32.totalorder %s18, 2
      // Predicated region
      $region21: #{tpu_custom_call.1} parent=5 // pred_check
        %p186 = pneg %p185
      $region22: #{tpu_custom_call.1} parent=5 // pred_check_branch
        %188 = sbr.rel (%p186) target = $region24
      $region23: #{tpu_custom_call.1} parent=5 // pred_region
        // Predicated region
        $region25: #{tpu_custom_call.1} parent=23 // pred_check
          %p189 = pneg %p38
        $region26: #{tpu_custom_call.1} parent=23 // pred_check_branch
          %191 = sbr.rel (%p189) target = $region28
        $region27: #{tpu_custom_call.1} parent=23 // pred_region
          %s192 = smul.u32 32, %s18
          %p193 = scmp.lt.s32.totalorder %s192, 63
          %s194 = scalar_select %p193, %s192, 63
          %s195 = smul.addr %s194, 8
          %s196 = scalar_lea.vmem %s0, %s195
          %s197 = smul.u32 32, %s18
        $region28: #{tpu_custom_call.1} parent=23 // pred_fallthru
          _
      $region24: #{tpu_custom_call.1} parent=5 // pred_fallthru
        _
      %p198 = scmp.le.s32.totalorder 1, %s18
      %p199 = scmp.lt.s32.totalorder %s18, 3
      %p200 = pnand %p198, %p199
      %p201 = pneg %p200
      // Predicated region
      $region29: #{tpu_custom_call.1} parent=5 // pred_check
        _
      $region30: #{tpu_custom_call.1} parent=5 // pred_check_branch
        %203 = sbr.rel (%p200) target = $region32
      $region31: #{tpu_custom_call.1} parent=5 // pred_region
        %s204 = ssub.s32 %s18, 1
        %s205 = smul.u32 32, %s23
        %p206 = scmp.lt.s32.totalorder %s205, 63
        %s207 = scalar_select %p206, %s205, 63
        %s208 = smul.addr %s207, 8
        %s209 = scalar_lea.vmem %s0, %s208
        %p210 = pneg %p44
        %p211 = pneg %p41
        %p212 = pneg %p65
        %p213 = pneg %p62
        %p214 = pneg %p86
        %p215 = pneg %p83
        %p216 = pneg %p112
        %p217 = pneg %p109
        %s218 = smul.u32 32, %s23
        %p219 = scmp.lt.s32.totalorder %s218, 63
        %s220 = scalar_select %p219, %s218, 63
        %s221 = smul.addr %s220, 8
        %s222 = scalar_lea.vmem %s3, %s221
        %p223 = pneg %p138
        %p224 = pneg %p135
        %s225 = sand.u32 %s125, 1
        %s226 = scalar_lea.sflag [#allocation3], %s225
        %s227 = sand.u32 %s125, 1
        %s228 = smul.addr %s227, 128
        %s229 = scalar_lea.vmem [#allocation2], %s228
        %p230 = pneg %p164
        %p231 = pneg %p161
        %s232 = sand.u32 %s151, 1
        %s233 = scalar_lea.sflag [#allocation5], %s232
        %s234 = sand.u32 %s151, 1
        %s235 = smul.addr %s234, 2
        %s236 = scalar_lea.vmem [#allocation4], %s235
        %s237 = smul.u32 32, %s23
        %p238 = scmp.lt.s32.totalorder %s237, 63
        %s239 = scalar_select %p238, %s237, 63
        %s240 = smul.addr %s239, 8
        %s241 = scalar_lea.vmem %s0, %s240
        %s242 = smul.u32 32, %s23
        %s243 = smul.u32 32, %s23
        %p244 = scmp.lt.s32.totalorder %s243, 63
        %s245 = scalar_select %p244, %s243, 63
        %s246 = smul.addr %s245, 8
        %s247 = scalar_lea.vmem %s3, %s246
        %s248 = smul.u32 32, %s23
        %s249 = smul.u32 32, %s23
        %v250 = vld [vmem:[%s241] sm:$0xff]
        %v251 = vld [vmem:[%s241 + $0x8] sm:$0xff]
        %v252 = vld [vmem:[%s241 + $0x10] sm:$0xff]
        %v253 = vld [vmem:[%s241 + $0x18] sm:$0xff]
        %v254 = vld [vmem:[%s241 + $0x20] sm:$0xff]
        %v255 = vld [vmem:[%s241 + $0x28] sm:$0xff]
        %v256 = vld [vmem:[%s241 + $0x30] sm:$0xff]
        %v257 = vld [vmem:[%s241 + $0x38] sm:$0xff]
        %v258 = vld [vmem:[%s241 + $0x40] sm:$0xff]
        %v259 = vld [vmem:[%s241 + $0x48] sm:$0xff]
        %v260 = vld [vmem:[%s241 + $0x50] sm:$0xff]
        %v261 = vld [vmem:[%s241 + $0x58] sm:$0xff]
        %v262 = vld [vmem:[%s241 + $0x60] sm:$0xff]
        %v263 = vld [vmem:[%s241 + $0x68] sm:$0xff]
        %v264 = vld [vmem:[%s241 + $0x70] sm:$0xff]
        %v265 = vld [vmem:[%s241 + $0x78] sm:$0xff]
        %v266 = vld [vmem:[%s241 + $0x80] sm:$0xff]
        %v267 = vld [vmem:[%s241 + $0x88] sm:$0xff]
        %v268 = vld [vmem:[%s241 + $0x90] sm:$0xff]
        %v269 = vld [vmem:[%s241 + $0x98] sm:$0xff]
        %v270 = vld [vmem:[%s241 + $0xa0] sm:$0xff]
        %v271 = vld [vmem:[%s241 + $0xa8] sm:$0xff]
        %v272 = vld [vmem:[%s241 + $0xb0] sm:$0xff]
        %v273 = vld [vmem:[%s241 + $0xb8] sm:$0xff]
        %v274 = vld [vmem:[%s241 + $0xc0] sm:$0xff]
        %v275 = vld [vmem:[%s241 + $0xc8] sm:$0xff]
        %v276 = vld [vmem:[%s241 + $0xd0] sm:$0xff]
        %v277 = vld [vmem:[%s241 + $0xd8] sm:$0xff]
        %v278 = vld [vmem:[%s241 + $0xe0] sm:$0xff]
        %v279 = vld [vmem:[%s241 + $0xe8] sm:$0xff]
        %v280 = vld [vmem:[%s241 + $0xf0] sm:$0xff]
        %v281 = vld [vmem:[%s241 + $0xf8] sm:$0xff]
        %v282 = vld [vmem:[%s1] sm:$0xff]
        %v283 = vld [vmem:[%s1 + $0x8] sm:$0xff]
        %v284 = vld [vmem:[%s1 + $0x10] sm:$0xff]
        %v285 = vld [vmem:[%s1 + $0x18] sm:$0xff]
        %v286 = vld [vmem:[%s1 + $0x20] sm:$0xff]
        %v287 = vld [vmem:[%s1 + $0x28] sm:$0xff]
        %v288 = vld [vmem:[%s1 + $0x30] sm:$0xff]
        %v289 = vld [vmem:[%s1 + $0x38] sm:$0xff]
        %v290 = vld [vmem:[%s1 + $0x40] sm:$0xff]
        %v291 = vld [vmem:[%s1 + $0x48] sm:$0xff]
        %v292 = vld [vmem:[%s1 + $0x50] sm:$0xff]
        %v293 = vld [vmem:[%s1 + $0x58] sm:$0xff]
        %v294 = vld [vmem:[%s1 + $0x60] sm:$0xff]
        %v295 = vld [vmem:[%s1 + $0x68] sm:$0xff]
        %v296 = vld [vmem:[%s1 + $0x70] sm:$0xff]
        %v297 = vld [vmem:[%s1 + $0x78] sm:$0xff]
        %vm298 = vcmask 261120
        %v300 = vsel %vm298, %v250, 0
        %v303 = vsel %vm298, %v251, 0
        %v306 = vsel %vm298, %v252, 0
        %v309 = vsel %vm298, %v253, 0
        %v312 = vsel %vm298, %v254, 0
        %v315 = vsel %vm298, %v255, 0
        %v318 = vsel %vm298, %v256, 0
        %v321 = vsel %vm298, %v257, 0
        %v324 = vsel %vm298, %v258, 0
        %v327 = vsel %vm298, %v259, 0
        %v330 = vsel %vm298, %v260, 0
        %v333 = vsel %vm298, %v261, 0
        %v336 = vsel %vm298, %v262, 0
        %v339 = vsel %vm298, %v263, 0
        %v342 = vsel %vm298, %v264, 0
        %v345 = vsel %vm298, %v265, 0
        %v348 = vsel %vm298, %v266, 0
        %v351 = vsel %vm298, %v267, 0
        %v354 = vsel %vm298, %v268, 0
        %v357 = vsel %vm298, %v269, 0
        %v360 = vsel %vm298, %v270, 0
        %v363 = vsel %vm298, %v271, 0
        %v366 = vsel %vm298, %v272, 0
        %v369 = vsel %vm298, %v273, 0
        %v372 = vsel %vm298, %v274, 0
        %v375 = vsel %vm298, %v275, 0
        %v378 = vsel %vm298, %v276, 0
        %v381 = vsel %vm298, %v277, 0
        %v384 = vsel %vm298, %v278, 0
        %v387 = vsel %vm298, %v279, 0
        %v390 = vsel %vm298, %v280, 0
        %v393 = vsel %vm298, %v281, 0
        %v396 = vsel %vm298, %v282, 0
        %v399 = vsel %vm298, %v283, 0
        %v402 = vsel %vm298, %v284, 0
        %v405 = vsel %vm298, %v285, 0
        %v408 = vsel %vm298, %v286, 0
        %v411 = vsel %vm298, %v287, 0
        %v414 = vsel %vm298, %v288, 0
        %v417 = vsel %vm298, %v289, 0
        %v420 = vsel %vm298, %v290, 0
        %v423 = vsel %vm298, %v291, 0
        %v426 = vsel %vm298, %v292, 0
        %v429 = vsel %vm298, %v293, 0
        %v432 = vsel %vm298, %v294, 0
        %v435 = vsel %vm298, %v295, 0
        %v438 = vsel %vm298, %v296, 0
        %v441 = vsel %vm298, %v297, 0
        %443 = vmatprep.subr.mxu0 0.0
        %444 = vmatpush1.xpose.msra.mxu0 %v396
        %445 = vmatprep.subr.mxu0 0.0
        %446 = vmatpush1.xpose.msra.mxu0 %v399
        %447 = vmatprep.subr.mxu0 0.0
        %448 = vmatpush1.xpose.msra.mxu0 %v402
        %449 = vmatprep.subr.mxu0 0.0
        %450 = vmatpush1.xpose.msra.mxu0 %v405
        %451 = vmatprep.subr.mxu0 0.0
        %452 = vmatpush1.xpose.msra.mxu0 %v408
        %453 = vmatprep.subr.mxu0 0.0
        %454 = vmatpush1.xpose.msra.mxu0 %v411
        %455 = vmatprep.subr.mxu0 0.0
        %456 = vmatpush1.xpose.msra.mxu0 %v414
        %457 = vmatprep.subr.mxu0 0.0
        %458 = vmatpush1.xpose.msra.mxu0 %v417
        %459 = vmatprep.subr.mxu0 0.0
        %460 = vmatpush1.xpose.msra.mxu0 %v420
        %461 = vmatprep.subr.mxu0 0.0
        %462 = vmatpush1.xpose.msra.mxu0 %v423
        %463 = vmatprep.subr.mxu0 0.0
        %464 = vmatpush1.xpose.msra.mxu0 %v426
        %465 = vmatprep.subr.mxu0 0.0
        %466 = vmatpush1.xpose.msra.mxu0 %v429
        %467 = vmatprep.subr.mxu0 0.0
        %468 = vmatpush1.xpose.msra.mxu0 %v432
        %469 = vmatprep.subr.mxu0 0.0
        %470 = vmatpush1.xpose.msra.mxu0 %v435
        %471 = vmatprep.subr.mxu0 0.0
        %472 = vmatpush1.xpose.msra.mxu0 %v438
        %473 = vmatprep.subr.mxu0 0.0
        %474 = vmatpush1.xpose.msra.mxu0 %v441
        %475 = vmatprep.subr.mxu0 0.0
        %476 = vmatpush1.xpose.msra.mxu0 0.0
        %477 = vmatprep.subr.mxu0 0.0
        %478 = vmatpush1.xpose.msra.mxu0 0.0
        %479 = vmatprep.subr.mxu0 0.0
        %480 = vmatpush1.xpose.msra.mxu0 0.0
        %481 = vmatprep.subr.mxu0 0.0
        %482 = vmatpush1.xpose.msra.mxu0 0.0
        %483 = vmatprep.subr.mxu0 0.0
        %484 = vmatpush1.xpose.msra.mxu0 0.0
        %485 = vmatprep.subr.mxu0 0.0
        %486 = vmatpush1.xpose.msra.mxu0 0.0
        %487 = vmatprep.subr.mxu0 0.0
        %488 = vmatpush1.xpose.msra.mxu0 0.0
        %489 = vmatprep.subr.mxu0 0.0
        %490 = vmatpush1.xpose.msra.mxu0 0.0
        %491 = vmatprep.subr.mxu0 0.0
        %492 = vmatpush1.xpose.msra.mxu0 0.0
        %493 = vmatprep.subr.mxu0 0.0
        %494 = vmatpush1.xpose.msra.mxu0 0.0
        %495 = vmatprep.subr.mxu0 0.0
        %496 = vmatpush1.xpose.msra.mxu0 0.0
        %497 = vmatprep.subr.mxu0 0.0
        %498 = vmatpush1.xpose.msra.mxu0 0.0
        %499 = vmatprep.subr.mxu0 0.0
        %500 = vmatpush1.xpose.msra.mxu0 0.0
        %501 = vmatprep.subr.mxu0 0.0
        %502 = vmatpush1.xpose.msra.mxu0 0.0
        %503 = vmatprep.subr.mxu0 0.0
        %504 = vmatpush1.xpose.msra.mxu0 0.0
        %505 = vmatprep.subr.mxu0 0.0
        %506 = vmatpush1.xpose.msra.mxu0 0.0
        %507 = vmatprep.mubr.f32.mxu0 0.0
        %508 = vmatmul.mubr.f32.gmra.mrb[0].mxu0 %v300
        %v509 = vpop.f32.mrb[0].mxu0
        %v510 = vadd.f32 0.0, %v509
        %v511 = vpop.f32.mrb[0].mxu0
        %512 = vmatprep.mubr.f32.mxu0 0.0
        %513 = vmatmul.mubr.f32.gmra.mrb[0].mxu0 %v303
        %v514 = vpop.f32.mrb[0].mxu0
        %v515 = vadd.f32 0.0, %v514
        %v516 = vpop.f32.mrb[0].mxu0
        %517 = vmatprep.mubr.f32.mxu0 0.0
        %518 = vmatmul.mubr.f32.gmra.mrb[0].mxu0 %v306
        %v519 = vpop.f32.mrb[0].mxu0
        %v520 = vadd.f32 0.0, %v519
        %v521 = vpop.f32.mrb[0].mxu0
        %522 = vmatprep.mubr.f32.mxu0 0.0
        %523 = vmatmul.mubr.f32.gmra.mrb[0].mxu0 %v309
        %v524 = vpop.f32.mrb[0].mxu0
        %v525 = vadd.f32 0.0, %v524
        %v526 = vpop.f32.mrb[0].mxu0
        %527 = vmatprep.mubr.f32.mxu0 0.0
        %528 = vmatmul.mubr.f32.gmra.mrb[0].mxu0 %v312
        %v529 = vpop.f32.mrb[0].mxu0
        %v530 = vadd.f32 0.0, %v529
        %v531 = vpop.f32.mrb[0].mxu0
        %532 = vmatprep.mubr.f32.mxu0 0.0
        %533 = vmatmul.mubr.f32.gmra.mrb[0].mxu0 %v315
        %v534 = vpop.f32.mrb[0].mxu0
        %v535 = vadd.f32 0.0, %v534
        %v536 = vpop.f32.mrb[0].mxu0
        %537 = vmatprep.mubr.f32.mxu0 0.0
        %538 = vmatmul.mubr.f32.gmra.mrb[0].mxu0 %v318
        %v539 = vpop.f32.mrb[0].mxu0
        %v540 = vadd.f32 0.0, %v539
        %v541 = vpop.f32.mrb[0].mxu0
        %542 = vmatprep.mubr.f32.mxu0 0.0
        %543 = vmatmul.mubr.f32.gmra.mrb[0].mxu0 %v321
        %v544 = vpop.f32.mrb[0].mxu0
        %v545 = vadd.f32 0.0, %v544
        %v546 = vpop.f32.mrb[0].mxu0
        %547 = vmatprep.mubr.f32.mxu0 0.0
        %548 = vmatmul.mubr.f32.gmra.mrb[0].mxu0 %v324
        %v549 = vpop.f32.mrb[0].mxu0
        %v550 = vadd.f32 0.0, %v549
        %v551 = vpop.f32.mrb[0].mxu0
        %552 = vmatprep.mubr.f32.mxu0 0.0
        %553 = vmatmul.mubr.f32.gmra.mrb[0].mxu0 %v327
        %v554 = vpop.f32.mrb[0].mxu0
        %v555 = vadd.f32 0.0, %v554
        %v556 = vpop.f32.mrb[0].mxu0
        %557 = vmatprep.mubr.f32.mxu0 0.0
        %558 = vmatmul.mubr.f32.gmra.mrb[0].mxu0 %v330
        %v559 = vpop.f32.mrb[0].mxu0
        %v560 = vadd.f32 0.0, %v559
        %v561 = vpop.f32.mrb[0].mxu0
        %562 = vmatprep.mubr.f32.mxu0 0.0
        %563 = vmatmul.mubr.f32.gmra.mrb[0].mxu0 %v333
        %v564 = vpop.f32.mrb[0].mxu0
        %v565 = vadd.f32 0.0, %v564
        %v566 = vpop.f32.mrb[0].mxu0
        %567 = vmatprep.mubr.f32.mxu0 0.0
        %568 = vmatmul.mubr.f32.gmra.mrb[0].mxu0 %v336
        %v569 = vpop.f32.mrb[0].mxu0
        %v570 = vadd.f32 0.0, %v569
        %v571 = vpop.f32.mrb[0].mxu0
        %572 = vmatprep.mubr.f32.mxu0 0.0
        %573 = vmatmul.mubr.f32.gmra.mrb[0].mxu0 %v339
        %v574 = vpop.f32.mrb[0].mxu0
        %v575 = vadd.f32 0.0, %v574
        %v576 = vpop.f32.mrb[0].mxu0
        %577 = vmatprep.mubr.f32.mxu0 0.0
        %578 = vmatmul.mubr.f32.gmra.mrb[0].mxu0 %v342
        %v579 = vpop.f32.mrb[0].mxu0
        %v580 = vadd.f32 0.0, %v579
        %v581 = vpop.f32.mrb[0].mxu0
        %582 = vmatprep.mubr.f32.mxu0 0.0
        %583 = vmatmul.mubr.f32.gmra.mrb[0].mxu0 %v345
        %v584 = vpop.f32.mrb[0].mxu0
        %v585 = vadd.f32 0.0, %v584
        %v586 = vpop.f32.mrb[0].mxu0
        %587 = vmatprep.mubr.f32.mxu0 0.0
        %588 = vmatmul.mubr.f32.gmra.mrb[0].mxu0 %v348
        %v589 = vpop.f32.mrb[0].mxu0
        %v590 = vadd.f32 0.0, %v589
        %v591 = vpop.f32.mrb[0].mxu0
        %592 = vmatprep.mubr.f32.mxu0 0.0
        %593 = vmatmul.mubr.f32.gmra.mrb[0].mxu0 %v351
        %v594 = vpop.f32.mrb[0].mxu0
        %v595 = vadd.f32 0.0, %v594
        %v596 = vpop.f32.mrb[0].mxu0
        %597 = vmatprep.mubr.f32.mxu0 0.0
        %598 = vmatmul.mubr.f32.gmra.mrb[0].mxu0 %v354
        %v599 = vpop.f32.mrb[0].mxu0
        %v600 = vadd.f32 0.0, %v599
        %v601 = vpop.f32.mrb[0].mxu0
        %602 = vmatprep.mubr.f32.mxu0 0.0
        %603 = vmatmul.mubr.f32.gmra.mrb[0].mxu0 %v357
        %v604 = vpop.f32.mrb[0].mxu0
        %v605 = vadd.f32 0.0, %v604
        %v606 = vpop.f32.mrb[0].mxu0
        %607 = vmatprep.mubr.f32.mxu0 0.0
        %608 = vmatmul.mubr.f32.gmra.mrb[0].mxu0 %v360
        %v609 = vpop.f32.mrb[0].mxu0
        %v610 = vadd.f32 0.0, %v609
        %v611 = vpop.f32.mrb[0].mxu0
        %612 = vmatprep.mubr.f32.mxu0 0.0
        %613 = vmatmul.mubr.f32.gmra.mrb[0].mxu0 %v363
        %v614 = vpop.f32.mrb[0].mxu0
        %v615 = vadd.f32 0.0, %v614
        %v616 = vpop.f32.mrb[0].mxu0
        %617 = vmatprep.mubr.f32.mxu0 0.0
        %618 = vmatmul.mubr.f32.gmra.mrb[0].mxu0 %v366
        %v619 = vpop.f32.mrb[0].mxu0
        %v620 = vadd.f32 0.0, %v619
        %v621 = vpop.f32.mrb[0].mxu0
        %622 = vmatprep.mubr.f32.mxu0 0.0
        %623 = vmatmul.mubr.f32.gmra.mrb[0].mxu0 %v369
        %v624 = vpop.f32.mrb[0].mxu0
        %v625 = vadd.f32 0.0, %v624
        %v626 = vpop.f32.mrb[0].mxu0
        %627 = vmatprep.mubr.f32.mxu0 0.0
        %628 = vmatmul.mubr.f32.gmra.mrb[0].mxu0 %v372
        %v629 = vpop.f32.mrb[0].mxu0
        %v630 = vadd.f32 0.0, %v629
        %v631 = vpop.f32.mrb[0].mxu0
        %632 = vmatprep.mubr.f32.mxu0 0.0
        %633 = vmatmul.mubr.f32.gmra.mrb[0].mxu0 %v375
        %v634 = vpop.f32.mrb[0].mxu0
        %v635 = vadd.f32 0.0, %v634
        %v636 = vpop.f32.mrb[0].mxu0
        %637 = vmatprep.mubr.f32.mxu0 0.0
        %638 = vmatmul.mubr.f32.gmra.mrb[0].mxu0 %v378
        %v639 = vpop.f32.mrb[0].mxu0
        %v640 = vadd.f32 0.0, %v639
        %v641 = vpop.f32.mrb[0].mxu0
        %642 = vmatprep.mubr.f32.mxu0 0.0
        %643 = vmatmul.mubr.f32.gmra.mrb[0].mxu0 %v381
        %v644 = vpop.f32.mrb[0].mxu0
        %v645 = vadd.f32 0.0, %v644
        %v646 = vpop.f32.mrb[0].mxu0
        %647 = vmatprep.mubr.f32.mxu0 0.0
        %648 = vmatmul.mubr.f32.gmra.mrb[0].mxu0 %v384
        %v649 = vpop.f32.mrb[0].mxu0
        %v650 = vadd.f32 0.0, %v649
        %v651 = vpop.f32.mrb[0].mxu0
        %652 = vmatprep.mubr.f32.mxu0 0.0
        %653 = vmatmul.mubr.f32.gmra.mrb[0].mxu0 %v387
        %v654 = vpop.f32.mrb[0].mxu0
        %v655 = vadd.f32 0.0, %v654
        %v656 = vpop.f32.mrb[0].mxu0
        %657 = vmatprep.mubr.f32.mxu0 0.0
        %658 = vmatmul.mubr.f32.gmra.mrb[0].mxu0 %v390
        %v659 = vpop.f32.mrb[0].mxu0
        %v660 = vadd.f32 0.0, %v659
        %v661 = vpop.f32.mrb[0].mxu0
        %662 = vmatprep.mubr.f32.mxu0 0.0
        %663 = vmatmul.mubr.f32.gmra.mrb[0].mxu0 %v393
        %v664 = vpop.f32.mrb[0].mxu0
        %v665 = vadd.f32 0.0, %v664
        %v666 = vpop.f32.mrb[0].mxu0
        %667 = vdwg.mxu0
        %v668 = vld [vmem:[%s2] sm:$0x1]
        %v670 = vlaneseq
        %v671 = vshrl.u32 %v670, 7
        %v672 = vsub.s32 0, %v671
        %v673 = vrot.slane %v668, %v672
        %v675 = vsub.f32 %v673, %v510
        %v676 = vsub.f32 %v673, %v515
        %v677 = vsub.f32 %v673, %v520
        %v678 = vsub.f32 %v673, %v525
        %v679 = vsub.f32 %v673, %v530
        %v680 = vsub.f32 %v673, %v535
        %v681 = vsub.f32 %v673, %v540
        %v682 = vsub.f32 %v673, %v545
        %v683 = vsub.f32 %v673, %v550
        %v684 = vsub.f32 %v673, %v555
        %v685 = vsub.f32 %v673, %v560
        %v686 = vsub.f32 %v673, %v565
        %v687 = vsub.f32 %v673, %v570
        %v688 = vsub.f32 %v673, %v575
        %v689 = vsub.f32 %v673, %v580
        %v690 = vsub.f32 %v673, %v585
        %v691 = vsub.f32 %v673, %v590
        %v692 = vsub.f32 %v673, %v595
        %v693 = vsub.f32 %v673, %v600
        %v694 = vsub.f32 %v673, %v605
        %v695 = vsub.f32 %v673, %v610
        %v696 = vsub.f32 %v673, %v615
        %v697 = vsub.f32 %v673, %v620
        %v698 = vsub.f32 %v673, %v625
        %v699 = vsub.f32 %v673, %v630
        %v700 = vsub.f32 %v673, %v635
        %v701 = vsub.f32 %v673, %v640
        %v702 = vsub.f32 %v673, %v645
        %v703 = vsub.f32 %v673, %v650
        %v704 = vsub.f32 %v673, %v655
        %v705 = vsub.f32 %v673, %v660
        %v706 = vsub.f32 %v673, %v665
        %v707 = vlaneseq
        %v708 = vand.u32 %v707, 127
        %709 = vmin.xlane.f32.xlu0 %v675
        %v710 = vpop.xlane.xlu0 %709
        %711 = vmin.xlane.f32.xlu0 %v676
        %v712 = vpop.xlane.xlu0 %711
        %713 = vmin.xlane.f32.xlu0 %v677
        %v714 = vpop.xlane.xlu0 %713
        %715 = vmin.xlane.f32.xlu0 %v678
        %v716 = vpop.xlane.xlu0 %715
        %717 = vmin.xlane.f32.xlu0 %v679
        %v718 = vpop.xlane.xlu0 %717
        %719 = vmin.xlane.f32.xlu0 %v680
        %v720 = vpop.xlane.xlu0 %719
        %721 = vmin.xlane.f32.xlu0 %v681
        %v722 = vpop.xlane.xlu0 %721
        %723 = vmin.xlane.f32.xlu0 %v682
        %v724 = vpop.xlane.xlu0 %723
        %725 = vmin.xlane.f32.xlu0 %v683
        %v726 = vpop.xlane.xlu0 %725
        %727 = vmin.xlane.f32.xlu0 %v684
        %v728 = vpop.xlane.xlu0 %727
        %729 = vmin.xlane.f32.xlu0 %v685
        %v730 = vpop.xlane.xlu0 %729
        %731 = vmin.xlane.f32.xlu0 %v686
        %v732 = vpop.xlane.xlu0 %731
        %733 = vmin.xlane.f32.xlu0 %v687
        %v734 = vpop.xlane.xlu0 %733
        %735 = vmin.xlane.f32.xlu0 %v688
        %v736 = vpop.xlane.xlu0 %735
        %737 = vmin.xlane.f32.xlu0 %v689
        %v738 = vpop.xlane.xlu0 %737
        %739 = vmin.xlane.f32.xlu0 %v690
        %v740 = vpop.xlane.xlu0 %739
        %741 = vmin.xlane.f32.xlu0 %v691
        %v742 = vpop.xlane.xlu0 %741
        %743 = vmin.xlane.f32.xlu0 %v692
        %v744 = vpop.xlane.xlu0 %743
        %745 = vmin.xlane.f32.xlu0 %v693
        %v746 = vpop.xlane.xlu0 %745
        %747 = vmin.xlane.f32.xlu0 %v694
        %v748 = vpop.xlane.xlu0 %747
        %749 = vmin.xlane.f32.xlu0 %v695
        %v750 = vpop.xlane.xlu0 %749
        %751 = vmin.xlane.f32.xlu0 %v696
        %v752 = vpop.xlane.xlu0 %751
        %753 = vmin.xlane.f32.xlu0 %v697
        %v754 = vpop.xlane.xlu0 %753
        %755 = vmin.xlane.f32.xlu0 %v698
        %v756 = vpop.xlane.xlu0 %755
        %757 = vmin.xlane.f32.xlu0 %v699
        %v758 = vpop.xlane.xlu0 %757
        %759 = vmin.xlane.f32.xlu0 %v700
        %v760 = vpop.xlane.xlu0 %759
        %761 = vmin.xlane.f32.xlu0 %v701
        %v762 = vpop.xlane.xlu0 %761
        %763 = vmin.xlane.f32.xlu0 %v702
        %v764 = vpop.xlane.xlu0 %763
        %765 = vmin.xlane.f32.xlu0 %v703
        %v766 = vpop.xlane.xlu0 %765
        %767 = vmin.xlane.f32.xlu0 %v704
        %v768 = vpop.xlane.xlu0 %767
        %769 = vmin.xlane.f32.xlu0 %v705
        %v770 = vpop.xlane.xlu0 %769
        %771 = vmin.xlane.f32.xlu0 %v706
        %v772 = vpop.xlane.xlu0 %771
        %vm773 = vcmp.le.f32.partialorder %v675, %v710
        %vm774 = vcmp.le.f32.partialorder %v676, %v712
        %vm775 = vcmp.le.f32.partialorder %v677, %v714
        %vm776 = vcmp.le.f32.partialorder %v678, %v716
        %vm777 = vcmp.le.f32.partialorder %v679, %v718
        %vm778 = vcmp.le.f32.partialorder %v680, %v720
        %vm779 = vcmp.le.f32.partialorder %v681, %v722
        %vm780 = vcmp.le.f32.partialorder %v682, %v724
        %vm781 = vcmp.le.f32.partialorder %v683, %v726
        %vm782 = vcmp.le.f32.partialorder %v684, %v728
        %vm783 = vcmp.le.f32.partialorder %v685, %v730
        %vm784 = vcmp.le.f32.partialorder %v686, %v732
        %vm785 = vcmp.le.f32.partialorder %v687, %v734
        %vm786 = vcmp.le.f32.partialorder %v688, %v736
        %vm787 = vcmp.le.f32.partialorder %v689, %v738
        %vm788 = vcmp.le.f32.partialorder %v690, %v740
        %vm789 = vcmp.le.f32.partialorder %v691, %v742
        %vm790 = vcmp.le.f32.partialorder %v692, %v744
        %vm791 = vcmp.le.f32.partialorder %v693, %v746
        %vm792 = vcmp.le.f32.partialorder %v694, %v748
        %vm793 = vcmp.le.f32.partialorder %v695, %v750
        %vm794 = vcmp.le.f32.partialorder %v696, %v752
        %vm795 = vcmp.le.f32.partialorder %v697, %v754
        %vm796 = vcmp.le.f32.partialorder %v698, %v756
        %vm797 = vcmp.le.f32.partialorder %v699, %v758
        %vm798 = vcmp.le.f32.partialorder %v700, %v760
        %vm799 = vcmp.le.f32.partialorder %v701, %v762
        %vm800 = vcmp.le.f32.partialorder %v702, %v764
        %vm801 = vcmp.le.f32.partialorder %v703, %v766
        %vm802 = vcmp.le.f32.partialorder %v704, %v768
        %vm803 = vcmp.le.f32.partialorder %v705, %v770
        %vm804 = vcmp.le.f32.partialorder %v706, %v772
        %v805 = vsel %vm773, %v708, 128
        %v806 = vsel %vm774, %v708, 128
        %v807 = vsel %vm775, %v708, 128
        %v808 = vsel %vm776, %v708, 128
        %v809 = vsel %vm777, %v708, 128
        %v810 = vsel %vm778, %v708, 128
        %v811 = vsel %vm779, %v708, 128
        %v812 = vsel %vm780, %v708, 128
        %v813 = vsel %vm781, %v708, 128
        %v814 = vsel %vm782, %v708, 128
        %v815 = vsel %vm783, %v708, 128
        %v816 = vsel %vm784, %v708, 128
        %v817 = vsel %vm785, %v708, 128
        %v818 = vsel %vm786, %v708, 128
        %v819 = vsel %vm787, %v708, 128
        %v820 = vsel %vm788, %v708, 128
        %v821 = vsel %vm789, %v708, 128
        %v822 = vsel %vm790, %v708, 128
        %v823 = vsel %vm791, %v708, 128
        %v824 = vsel %vm792, %v708, 128
        %v825 = vsel %vm793, %v708, 128
        %v826 = vsel %vm794, %v708, 128
        %v827 = vsel %vm795, %v708, 128
        %v828 = vsel %vm796, %v708, 128
        %v829 = vsel %vm797, %v708, 128
        %v830 = vsel %vm798, %v708, 128
        %v831 = vsel %vm799, %v708, 128
        %v832 = vsel %vm800, %v708, 128
        %v833 = vsel %vm801, %v708, 128
        %v834 = vsel %vm802, %v708, 128
        %v835 = vsel %vm803, %v708, 128
        %v836 = vsel %vm804, %v708, 128
        %v837 = vand.u32 %v805, 65535
        %v838 = vshra.s32 %v805, 16
        %v839 = vcvt.s32.f32 %v837
        %v840 = vcvt.s32.f32 %v838
        %841 = vmin.xlane.f32.xlu0 %v840
        %v842 = vpop.xlane.xlu0 %841
        %vm843 = vcmp.eq.f32.partialorder %v840, %v842
        %v844 = vsel %vm843, %v839, inf
        %845 = vmin.xlane.f32.xlu0 %v844
        %v846 = vpop.xlane.xlu0 %845
        %v847 = vcvt.f32.s32 %v846
        %v848 = vcvt.f32.s32 %v842
        %v849 = vshll.u32 %v848, 16
        %v850 = vadd.s32 %v849, %v847
        %v851 = vand.u32 %v806, 65535
        %v852 = vshra.s32 %v806, 16
        %v853 = vcvt.s32.f32 %v851
        %v854 = vcvt.s32.f32 %v852
        %855 = vmin.xlane.f32.xlu0 %v854
        %v856 = vpop.xlane.xlu0 %855
        %vm857 = vcmp.eq.f32.partialorder %v854, %v856
        %v858 = vsel %vm857, %v853, inf
        %859 = vmin.xlane.f32.xlu0 %v858
        %v860 = vpop.xlane.xlu0 %859
        %v861 = vcvt.f32.s32 %v860
        %v862 = vcvt.f32.s32 %v856
        %v863 = vshll.u32 %v862, 16
        %v864 = vadd.s32 %v863, %v861
        %v865 = vand.u32 %v807, 65535
        %v866 = vshra.s32 %v807, 16
        %v867 = vcvt.s32.f32 %v865
        %v868 = vcvt.s32.f32 %v866
        %869 = vmin.xlane.f32.xlu0 %v868
        %v870 = vpop.xlane.xlu0 %869
        %vm871 = vcmp.eq.f32.partialorder %v868, %v870
        %v872 = vsel %vm871, %v867, inf
        %873 = vmin.xlane.f32.xlu0 %v872
        %v874 = vpop.xlane.xlu0 %873
        %v875 = vcvt.f32.s32 %v874
        %v876 = vcvt.f32.s32 %v870
        %v877 = vshll.u32 %v876, 16
        %v878 = vadd.s32 %v877, %v875
        %v879 = vand.u32 %v808, 65535
        %v880 = vshra.s32 %v808, 16
        %v881 = vcvt.s32.f32 %v879
        %v882 = vcvt.s32.f32 %v880
        %883 = vmin.xlane.f32.xlu0 %v882
        %v884 = vpop.xlane.xlu0 %883
        %vm885 = vcmp.eq.f32.partialorder %v882, %v884
        %v886 = vsel %vm885, %v881, inf
        %887 = vmin.xlane.f32.xlu0 %v886
        %v888 = vpop.xlane.xlu0 %887
        %v889 = vcvt.f32.s32 %v888
        %v890 = vcvt.f32.s32 %v884
        %v891 = vshll.u32 %v890, 16
        %v892 = vadd.s32 %v891, %v889
        %v893 = vand.u32 %v809, 65535
        %v894 = vshra.s32 %v809, 16
        %v895 = vcvt.s32.f32 %v893
        %v896 = vcvt.s32.f32 %v894
        %897 = vmin.xlane.f32.xlu0 %v896
        %v898 = vpop.xlane.xlu0 %897
        %vm899 = vcmp.eq.f32.partialorder %v896, %v898
        %v900 = vsel %vm899, %v895, inf
        %901 = vmin.xlane.f32.xlu0 %v900
        %v902 = vpop.xlane.xlu0 %901
        %v903 = vcvt.f32.s32 %v902
        %v904 = vcvt.f32.s32 %v898
        %v905 = vshll.u32 %v904, 16
        %v906 = vadd.s32 %v905, %v903
        %v907 = vand.u32 %v810, 65535
        %v908 = vshra.s32 %v810, 16
        %v909 = vcvt.s32.f32 %v907
        %v910 = vcvt.s32.f32 %v908
        %911 = vmin.xlane.f32.xlu0 %v910
        %v912 = vpop.xlane.xlu0 %911
        %vm913 = vcmp.eq.f32.partialorder %v910, %v912
        %v914 = vsel %vm913, %v909, inf
        %915 = vmin.xlane.f32.xlu0 %v914
        %v916 = vpop.xlane.xlu0 %915
        %v917 = vcvt.f32.s32 %v916
        %v918 = vcvt.f32.s32 %v912
        %v919 = vshll.u32 %v918, 16
        %v920 = vadd.s32 %v919, %v917
        %v921 = vand.u32 %v811, 65535
        %v922 = vshra.s32 %v811, 16
        %v923 = vcvt.s32.f32 %v921
        %v924 = vcvt.s32.f32 %v922
        %925 = vmin.xlane.f32.xlu0 %v924
        %v926 = vpop.xlane.xlu0 %925
        %vm927 = vcmp.eq.f32.partialorder %v924, %v926
        %v928 = vsel %vm927, %v923, inf
        %929 = vmin.xlane.f32.xlu0 %v928
        %v930 = vpop.xlane.xlu0 %929
        %v931 = vcvt.f32.s32 %v930
        %v932 = vcvt.f32.s32 %v926
        %v933 = vshll.u32 %v932, 16
        %v934 = vadd.s32 %v933, %v931
        %v935 = vand.u32 %v812, 65535
        %v936 = vshra.s32 %v812, 16
        %v937 = vcvt.s32.f32 %v935
        %v938 = vcvt.s32.f32 %v936
        %939 = vmin.xlane.f32.xlu0 %v938
        %v940 = vpop.xlane.xlu0 %939
        %vm941 = vcmp.eq.f32.partialorder %v938, %v940
        %v942 = vsel %vm941, %v937, inf
        %943 = vmin.xlane.f32.xlu0 %v942
        %v944 = vpop.xlane.xlu0 %943
        %v945 = vcvt.f32.s32 %v944
        %v946 = vcvt.f32.s32 %v940
        %v947 = vshll.u32 %v946, 16
        %v948 = vadd.s32 %v947, %v945
        %v949 = vand.u32 %v813, 65535
        %v950 = vshra.s32 %v813, 16
        %v951 = vcvt.s32.f32 %v949
        %v952 = vcvt.s32.f32 %v950
        %953 = vmin.xlane.f32.xlu0 %v952
        %v954 = vpop.xlane.xlu0 %953
        %vm955 = vcmp.eq.f32.partialorder %v952, %v954
        %v956 = vsel %vm955, %v951, inf
        %957 = vmin.xlane.f32.xlu0 %v956
        %v958 = vpop.xlane.xlu0 %957
        %v959 = vcvt.f32.s32 %v958
        %v960 = vcvt.f32.s32 %v954
        %v961 = vshll.u32 %v960, 16
        %v962 = vadd.s32 %v961, %v959
        %v963 = vand.u32 %v814, 65535
        %v964 = vshra.s32 %v814, 16
        %v965 = vcvt.s32.f32 %v963
        %v966 = vcvt.s32.f32 %v964
        %967 = vmin.xlane.f32.xlu0 %v966
        %v968 = vpop.xlane.xlu0 %967
        %vm969 = vcmp.eq.f32.partialorder %v966, %v968
        %v970 = vsel %vm969, %v965, inf
        %971 = vmin.xlane.f32.xlu0 %v970
        %v972 = vpop.xlane.xlu0 %971
        %v973 = vcvt.f32.s32 %v972
        %v974 = vcvt.f32.s32 %v968
        %v975 = vshll.u32 %v974, 16
        %v976 = vadd.s32 %v975, %v973
        %v977 = vand.u32 %v815, 65535
        %v978 = vshra.s32 %v815, 16
        %v979 = vcvt.s32.f32 %v977
        %v980 = vcvt.s32.f32 %v978
        %981 = vmin.xlane.f32.xlu0 %v980
        %v982 = vpop.xlane.xlu0 %981
        %vm983 = vcmp.eq.f32.partialorder %v980, %v982
        %v984 = vsel %vm983, %v979, inf
        %985 = vmin.xlane.f32.xlu0 %v984
        %v986 = vpop.xlane.xlu0 %985
        %v987 = vcvt.f32.s32 %v986
        %v988 = vcvt.f32.s32 %v982
        %v989 = vshll.u32 %v988, 16
        %v990 = vadd.s32 %v989, %v987
        %v991 = vand.u32 %v816, 65535
        %v992 = vshra.s32 %v816, 16
        %v993 = vcvt.s32.f32 %v991
        %v994 = vcvt.s32.f32 %v992
        %995 = vmin.xlane.f32.xlu0 %v994
        %v996 = vpop.xlane.xlu0 %995
        %vm997 = vcmp.eq.f32.partialorder %v994, %v996
        %v998 = vsel %vm997, %v993, inf
        %999 = vmin.xlane.f32.xlu0 %v998
        %v1000 = vpop.xlane.xlu0 %999
        %v1001 = vcvt.f32.s32 %v1000
        %v1002 = vcvt.f32.s32 %v996
        %v1003 = vshll.u32 %v1002, 16
        %v1004 = vadd.s32 %v1003, %v1001
        %v1005 = vand.u32 %v817, 65535
        %v1006 = vshra.s32 %v817, 16
        %v1007 = vcvt.s32.f32 %v1005
        %v1008 = vcvt.s32.f32 %v1006
        %1009 = vmin.xlane.f32.xlu0 %v1008
        %v1010 = vpop.xlane.xlu0 %1009
        %vm1011 = vcmp.eq.f32.partialorder %v1008, %v1010
        %v1012 = vsel %vm1011, %v1007, inf
        %1013 = vmin.xlane.f32.xlu0 %v1012
        %v1014 = vpop.xlane.xlu0 %1013
        %v1015 = vcvt.f32.s32 %v1014
        %v1016 = vcvt.f32.s32 %v1010
        %v1017 = vshll.u32 %v1016, 16
        %v1018 = vadd.s32 %v1017, %v1015
        %v1019 = vand.u32 %v818, 65535
        %v1020 = vshra.s32 %v818, 16
        %v1021 = vcvt.s32.f32 %v1019
        %v1022 = vcvt.s32.f32 %v1020
        %1023 = vmin.xlane.f32.xlu0 %v1022
        %v1024 = vpop.xlane.xlu0 %1023
        %vm1025 = vcmp.eq.f32.partialorder %v1022, %v1024
        %v1026 = vsel %vm1025, %v1021, inf
        %1027 = vmin.xlane.f32.xlu0 %v1026
        %v1028 = vpop.xlane.xlu0 %1027
        %v1029 = vcvt.f32.s32 %v1028
        %v1030 = vcvt.f32.s32 %v1024
        %v1031 = vshll.u32 %v1030, 16
        %v1032 = vadd.s32 %v1031, %v1029
        %v1033 = vand.u32 %v819, 65535
        %v1034 = vshra.s32 %v819, 16
        %v1035 = vcvt.s32.f32 %v1033
        %v1036 = vcvt.s32.f32 %v1034
        %1037 = vmin.xlane.f32.xlu0 %v1036
        %v1038 = vpop.xlane.xlu0 %1037
        %vm1039 = vcmp.eq.f32.partialorder %v1036, %v1038
        %v1040 = vsel %vm1039, %v1035, inf
        %1041 = vmin.xlane.f32.xlu0 %v1040
        %v1042 = vpop.xlane.xlu0 %1041
        %v1043 = vcvt.f32.s32 %v1042
        %v1044 = vcvt.f32.s32 %v1038
        %v1045 = vshll.u32 %v1044, 16
        %v1046 = vadd.s32 %v1045, %v1043
        %v1047 = vand.u32 %v820, 65535
        %v1048 = vshra.s32 %v820, 16
        %v1049 = vcvt.s32.f32 %v1047
        %v1050 = vcvt.s32.f32 %v1048
        %1051 = vmin.xlane.f32.xlu0 %v1050
        %v1052 = vpop.xlane.xlu0 %1051
        %vm1053 = vcmp.eq.f32.partialorder %v1050, %v1052
        %v1054 = vsel %vm1053, %v1049, inf
        %1055 = vmin.xlane.f32.xlu0 %v1054
        %v1056 = vpop.xlane.xlu0 %1055
        %v1057 = vcvt.f32.s32 %v1056
        %v1058 = vcvt.f32.s32 %v1052
        %v1059 = vshll.u32 %v1058, 16
        %v1060 = vadd.s32 %v1059, %v1057
        %v1061 = vand.u32 %v821, 65535
        %v1062 = vshra.s32 %v821, 16
        %v1063 = vcvt.s32.f32 %v1061
        %v1064 = vcvt.s32.f32 %v1062
        %1065 = vmin.xlane.f32.xlu0 %v1064
        %v1066 = vpop.xlane.xlu0 %1065
        %vm1067 = vcmp.eq.f32.partialorder %v1064, %v1066
        %v1068 = vsel %vm1067, %v1063, inf
        %1069 = vmin.xlane.f32.xlu0 %v1068
        %v1070 = vpop.xlane.xlu0 %1069
        %v1071 = vcvt.f32.s32 %v1070
        %v1072 = vcvt.f32.s32 %v1066
        %v1073 = vshll.u32 %v1072, 16
        %v1074 = vadd.s32 %v1073, %v1071
        %v1075 = vand.u32 %v822, 65535
        %v1076 = vshra.s32 %v822, 16
        %v1077 = vcvt.s32.f32 %v1075
        %v1078 = vcvt.s32.f32 %v1076
        %1079 = vmin.xlane.f32.xlu0 %v1078
        %v1080 = vpop.xlane.xlu0 %1079
        %vm1081 = vcmp.eq.f32.partialorder %v1078, %v1080
        %v1082 = vsel %vm1081, %v1077, inf
        %1083 = vmin.xlane.f32.xlu0 %v1082
        %v1084 = vpop.xlane.xlu0 %1083
        %v1085 = vcvt.f32.s32 %v1084
        %v1086 = vcvt.f32.s32 %v1080
        %v1087 = vshll.u32 %v1086, 16
        %v1088 = vadd.s32 %v1087, %v1085
        %v1089 = vand.u32 %v823, 65535
        %v1090 = vshra.s32 %v823, 16
        %v1091 = vcvt.s32.f32 %v1089
        %v1092 = vcvt.s32.f32 %v1090
        %1093 = vmin.xlane.f32.xlu0 %v1092
        %v1094 = vpop.xlane.xlu0 %1093
        %vm1095 = vcmp.eq.f32.partialorder %v1092, %v1094
        %v1096 = vsel %vm1095, %v1091, inf
        %1097 = vmin.xlane.f32.xlu0 %v1096
        %v1098 = vpop.xlane.xlu0 %1097
        %v1099 = vcvt.f32.s32 %v1098
        %v1100 = vcvt.f32.s32 %v1094
        %v1101 = vshll.u32 %v1100, 16
        %v1102 = vadd.s32 %v1101, %v1099
        %v1103 = vand.u32 %v824, 65535
        %v1104 = vshra.s32 %v824, 16
        %v1105 = vcvt.s32.f32 %v1103
        %v1106 = vcvt.s32.f32 %v1104
        %1107 = vmin.xlane.f32.xlu0 %v1106
        %v1108 = vpop.xlane.xlu0 %1107
        %vm1109 = vcmp.eq.f32.partialorder %v1106, %v1108
        %v1110 = vsel %vm1109, %v1105, inf
        %1111 = vmin.xlane.f32.xlu0 %v1110
        %v1112 = vpop.xlane.xlu0 %1111
        %v1113 = vcvt.f32.s32 %v1112
        %v1114 = vcvt.f32.s32 %v1108
        %v1115 = vshll.u32 %v1114, 16
        %v1116 = vadd.s32 %v1115, %v1113
        %v1117 = vand.u32 %v825, 65535
        %v1118 = vshra.s32 %v825, 16
        %v1119 = vcvt.s32.f32 %v1117
        %v1120 = vcvt.s32.f32 %v1118
        %1121 = vmin.xlane.f32.xlu0 %v1120
        %v1122 = vpop.xlane.xlu0 %1121
        %vm1123 = vcmp.eq.f32.partialorder %v1120, %v1122
        %v1124 = vsel %vm1123, %v1119, inf
        %1125 = vmin.xlane.f32.xlu0 %v1124
        %v1126 = vpop.xlane.xlu0 %1125
        %v1127 = vcvt.f32.s32 %v1126
        %v1128 = vcvt.f32.s32 %v1122
        %v1129 = vshll.u32 %v1128, 16
        %v1130 = vadd.s32 %v1129, %v1127
        %v1131 = vand.u32 %v826, 65535
        %v1132 = vshra.s32 %v826, 16
        %v1133 = vcvt.s32.f32 %v1131
        %v1134 = vcvt.s32.f32 %v1132
        %1135 = vmin.xlane.f32.xlu0 %v1134
        %v1136 = vpop.xlane.xlu0 %1135
        %vm1137 = vcmp.eq.f32.partialorder %v1134, %v1136
        %v1138 = vsel %vm1137, %v1133, inf
        %1139 = vmin.xlane.f32.xlu0 %v1138
        %v1140 = vpop.xlane.xlu0 %1139
        %v1141 = vcvt.f32.s32 %v1140
        %v1142 = vcvt.f32.s32 %v1136
        %v1143 = vshll.u32 %v1142, 16
        %v1144 = vadd.s32 %v1143, %v1141
        %v1145 = vand.u32 %v827, 65535
        %v1146 = vshra.s32 %v827, 16
        %v1147 = vcvt.s32.f32 %v1145
        %v1148 = vcvt.s32.f32 %v1146
        %1149 = vmin.xlane.f32.xlu0 %v1148
        %v1150 = vpop.xlane.xlu0 %1149
        %vm1151 = vcmp.eq.f32.partialorder %v1148, %v1150
        %v1152 = vsel %vm1151, %v1147, inf
        %1153 = vmin.xlane.f32.xlu0 %v1152
        %v1154 = vpop.xlane.xlu0 %1153
        %v1155 = vcvt.f32.s32 %v1154
        %v1156 = vcvt.f32.s32 %v1150
        %v1157 = vshll.u32 %v1156, 16
        %v1158 = vadd.s32 %v1157, %v1155
        %v1159 = vand.u32 %v828, 65535
        %v1160 = vshra.s32 %v828, 16
        %v1161 = vcvt.s32.f32 %v1159
        %v1162 = vcvt.s32.f32 %v1160
        %1163 = vmin.xlane.f32.xlu0 %v1162
        %v1164 = vpop.xlane.xlu0 %1163
        %vm1165 = vcmp.eq.f32.partialorder %v1162, %v1164
        %v1166 = vsel %vm1165, %v1161, inf
        %1167 = vmin.xlane.f32.xlu0 %v1166
        %v1168 = vpop.xlane.xlu0 %1167
        %v1169 = vcvt.f32.s32 %v1168
        %v1170 = vcvt.f32.s32 %v1164
        %v1171 = vshll.u32 %v1170, 16
        %v1172 = vadd.s32 %v1171, %v1169
        %v1173 = vand.u32 %v829, 65535
        %v1174 = vshra.s32 %v829, 16
        %v1175 = vcvt.s32.f32 %v1173
        %v1176 = vcvt.s32.f32 %v1174
        %1177 = vmin.xlane.f32.xlu0 %v1176
        %v1178 = vpop.xlane.xlu0 %1177
        %vm1179 = vcmp.eq.f32.partialorder %v1176, %v1178
        %v1180 = vsel %vm1179, %v1175, inf
        %1181 = vmin.xlane.f32.xlu0 %v1180
        %v1182 = vpop.xlane.xlu0 %1181
        %v1183 = vcvt.f32.s32 %v1182
        %v1184 = vcvt.f32.s32 %v1178
        %v1185 = vshll.u32 %v1184, 16
        %v1186 = vadd.s32 %v1185, %v1183
        %v1187 = vand.u32 %v830, 65535
        %v1188 = vshra.s32 %v830, 16
        %v1189 = vcvt.s32.f32 %v1187
        %v1190 = vcvt.s32.f32 %v1188
        %1191 = vmin.xlane.f32.xlu0 %v1190
        %v1192 = vpop.xlane.xlu0 %1191
        %vm1193 = vcmp.eq.f32.partialorder %v1190, %v1192
        %v1194 = vsel %vm1193, %v1189, inf
        %1195 = vmin.xlane.f32.xlu0 %v1194
        %v1196 = vpop.xlane.xlu0 %1195
        %v1197 = vcvt.f32.s32 %v1196
        %v1198 = vcvt.f32.s32 %v1192
        %v1199 = vshll.u32 %v1198, 16
        %v1200 = vadd.s32 %v1199, %v1197
        %v1201 = vand.u32 %v831, 65535
        %v1202 = vshra.s32 %v831, 16
        %v1203 = vcvt.s32.f32 %v1201
        %v1204 = vcvt.s32.f32 %v1202
        %1205 = vmin.xlane.f32.xlu0 %v1204
        %v1206 = vpop.xlane.xlu0 %1205
        %vm1207 = vcmp.eq.f32.partialorder %v1204, %v1206
        %v1208 = vsel %vm1207, %v1203, inf
        %1209 = vmin.xlane.f32.xlu0 %v1208
        %v1210 = vpop.xlane.xlu0 %1209
        %v1211 = vcvt.f32.s32 %v1210
        %v1212 = vcvt.f32.s32 %v1206
        %v1213 = vshll.u32 %v1212, 16
        %v1214 = vadd.s32 %v1213, %v1211
        %v1215 = vand.u32 %v832, 65535
        %v1216 = vshra.s32 %v832, 16
        %v1217 = vcvt.s32.f32 %v1215
        %v1218 = vcvt.s32.f32 %v1216
        %1219 = vmin.xlane.f32.xlu0 %v1218
        %v1220 = vpop.xlane.xlu0 %1219
        %vm1221 = vcmp.eq.f32.partialorder %v1218, %v1220
        %v1222 = vsel %vm1221, %v1217, inf
        %1223 = vmin.xlane.f32.xlu0 %v1222
        %v1224 = vpop.xlane.xlu0 %1223
        %v1225 = vcvt.f32.s32 %v1224
        %v1226 = vcvt.f32.s32 %v1220
        %v1227 = vshll.u32 %v1226, 16
        %v1228 = vadd.s32 %v1227, %v1225
        %v1229 = vand.u32 %v833, 65535
        %v1230 = vshra.s32 %v833, 16
        %v1231 = vcvt.s32.f32 %v1229
        %v1232 = vcvt.s32.f32 %v1230
        %1233 = vmin.xlane.f32.xlu0 %v1232
        %v1234 = vpop.xlane.xlu0 %1233
        %vm1235 = vcmp.eq.f32.partialorder %v1232, %v1234
        %v1236 = vsel %vm1235, %v1231, inf
        %1237 = vmin.xlane.f32.xlu0 %v1236
        %v1238 = vpop.xlane.xlu0 %1237
        %v1239 = vcvt.f32.s32 %v1238
        %v1240 = vcvt.f32.s32 %v1234
        %v1241 = vshll.u32 %v1240, 16
        %v1242 = vadd.s32 %v1241, %v1239
        %v1243 = vand.u32 %v834, 65535
        %v1244 = vshra.s32 %v834, 16
        %v1245 = vcvt.s32.f32 %v1243
        %v1246 = vcvt.s32.f32 %v1244
        %1247 = vmin.xlane.f32.xlu0 %v1246
        %v1248 = vpop.xlane.xlu0 %1247
        %vm1249 = vcmp.eq.f32.partialorder %v1246, %v1248
        %v1250 = vsel %vm1249, %v1245, inf
        %1251 = vmin.xlane.f32.xlu0 %v1250
        %v1252 = vpop.xlane.xlu0 %1251
        %v1253 = vcvt.f32.s32 %v1252
        %v1254 = vcvt.f32.s32 %v1248
        %v1255 = vshll.u32 %v1254, 16
        %v1256 = vadd.s32 %v1255, %v1253
        %v1257 = vand.u32 %v835, 65535
        %v1258 = vshra.s32 %v835, 16
        %v1259 = vcvt.s32.f32 %v1257
        %v1260 = vcvt.s32.f32 %v1258
        %1261 = vmin.xlane.f32.xlu0 %v1260
        %v1262 = vpop.xlane.xlu0 %1261
        %vm1263 = vcmp.eq.f32.partialorder %v1260, %v1262
        %v1264 = vsel %vm1263, %v1259, inf
        %1265 = vmin.xlane.f32.xlu0 %v1264
        %v1266 = vpop.xlane.xlu0 %1265
        %v1267 = vcvt.f32.s32 %v1266
        %v1268 = vcvt.f32.s32 %v1262
        %v1269 = vshll.u32 %v1268, 16
        %v1270 = vadd.s32 %v1269, %v1267
        %v1271 = vand.u32 %v836, 65535
        %v1272 = vshra.s32 %v836, 16
        %v1273 = vcvt.s32.f32 %v1271
        %v1274 = vcvt.s32.f32 %v1272
        %1275 = vmin.xlane.f32.xlu0 %v1274
        %v1276 = vpop.xlane.xlu0 %1275
        %vm1277 = vcmp.eq.f32.partialorder %v1274, %v1276
        %v1278 = vsel %vm1277, %v1273, inf
        %1279 = vmin.xlane.f32.xlu0 %v1278
        %v1280 = vpop.xlane.xlu0 %1279
        %v1281 = vcvt.f32.s32 %v1280
        %v1282 = vcvt.f32.s32 %v1276
        %v1283 = vshll.u32 %v1282, 16
        %v1284 = vadd.s32 %v1283, %v1281
        %vm1285 = vcmp.eq.s32.totalorder %v708, %v850
        %vm1286 = vcmp.eq.s32.totalorder %v708, %v864
        %vm1287 = vcmp.eq.s32.totalorder %v708, %v878
        %vm1288 = vcmp.eq.s32.totalorder %v708, %v892
        %vm1289 = vcmp.eq.s32.totalorder %v708, %v906
        %vm1290 = vcmp.eq.s32.totalorder %v708, %v920
        %vm1291 = vcmp.eq.s32.totalorder %v708, %v934
        %vm1292 = vcmp.eq.s32.totalorder %v708, %v948
        %vm1293 = vcmp.eq.s32.totalorder %v708, %v962
        %vm1294 = vcmp.eq.s32.totalorder %v708, %v976
        %vm1295 = vcmp.eq.s32.totalorder %v708, %v990
        %vm1296 = vcmp.eq.s32.totalorder %v708, %v1004
        %vm1297 = vcmp.eq.s32.totalorder %v708, %v1018
        %vm1298 = vcmp.eq.s32.totalorder %v708, %v1032
        %vm1299 = vcmp.eq.s32.totalorder %v708, %v1046
        %vm1300 = vcmp.eq.s32.totalorder %v708, %v1060
        %vm1301 = vcmp.eq.s32.totalorder %v708, %v1074
        %vm1302 = vcmp.eq.s32.totalorder %v708, %v1088
        %vm1303 = vcmp.eq.s32.totalorder %v708, %v1102
        %vm1304 = vcmp.eq.s32.totalorder %v708, %v1116
        %vm1305 = vcmp.eq.s32.totalorder %v708, %v1130
        %vm1306 = vcmp.eq.s32.totalorder %v708, %v1144
        %vm1307 = vcmp.eq.s32.totalorder %v708, %v1158
        %vm1308 = vcmp.eq.s32.totalorder %v708, %v1172
        %vm1309 = vcmp.eq.s32.totalorder %v708, %v1186
        %vm1310 = vcmp.eq.s32.totalorder %v708, %v1200
        %vm1311 = vcmp.eq.s32.totalorder %v708, %v1214
        %vm1312 = vcmp.eq.s32.totalorder %v708, %v1228
        %vm1313 = vcmp.eq.s32.totalorder %v708, %v1242
        %vm1314 = vcmp.eq.s32.totalorder %v708, %v1256
        %vm1315 = vcmp.eq.s32.totalorder %v708, %v1270
        %vm1316 = vcmp.eq.s32.totalorder %v708, %v1284
        %v1317 = vsel %vm1285, 1, 0
        %v1318 = vsel %vm1286, 1, 0
        %v1319 = vsel %vm1287, 1, 0
        %v1320 = vsel %vm1288, 1, 0
        %v1321 = vsel %vm1289, 1, 0
        %v1322 = vsel %vm1290, 1, 0
        %v1323 = vsel %vm1291, 1, 0
        %v1324 = vsel %vm1292, 1, 0
        %v1325 = vsel %vm1293, 1, 0
        %v1326 = vsel %vm1294, 1, 0
        %v1327 = vsel %vm1295, 1, 0
        %v1328 = vsel %vm1296, 1, 0
        %v1329 = vsel %vm1297, 1, 0
        %v1330 = vsel %vm1298, 1, 0
        %v1331 = vsel %vm1299, 1, 0
        %v1332 = vsel %vm1300, 1, 0
        %v1333 = vsel %vm1301, 1, 0
        %v1334 = vsel %vm1302, 1, 0
        %v1335 = vsel %vm1303, 1, 0
        %v1336 = vsel %vm1304, 1, 0
        %v1337 = vsel %vm1305, 1, 0
        %v1338 = vsel %vm1306, 1, 0
        %v1339 = vsel %vm1307, 1, 0
        %v1340 = vsel %vm1308, 1, 0
        %v1341 = vsel %vm1309, 1, 0
        %v1342 = vsel %vm1310, 1, 0
        %v1343 = vsel %vm1311, 1, 0
        %v1344 = vsel %vm1312, 1, 0
        %v1345 = vsel %vm1313, 1, 0
        %v1346 = vsel %vm1314, 1, 0
        %v1347 = vsel %vm1315, 1, 0
        %v1348 = vsel %vm1316, 1, 0
        %v1349 = vcvt.s32.f32 %v1317
        %v1350 = vcvt.s32.f32 %v1318
        %v1351 = vcvt.s32.f32 %v1319
        %v1352 = vcvt.s32.f32 %v1320
        %v1353 = vcvt.s32.f32 %v1321
        %v1354 = vcvt.s32.f32 %v1322
        %v1355 = vcvt.s32.f32 %v1323
        %v1356 = vcvt.s32.f32 %v1324
        %v1357 = vcvt.s32.f32 %v1325
        %v1358 = vcvt.s32.f32 %v1326
        %v1359 = vcvt.s32.f32 %v1327
        %v1360 = vcvt.s32.f32 %v1328
        %v1361 = vcvt.s32.f32 %v1329
        %v1362 = vcvt.s32.f32 %v1330
        %v1363 = vcvt.s32.f32 %v1331
        %v1364 = vcvt.s32.f32 %v1332
        %v1365 = vcvt.s32.f32 %v1333
        %v1366 = vcvt.s32.f32 %v1334
        %v1367 = vcvt.s32.f32 %v1335
        %v1368 = vcvt.s32.f32 %v1336
        %v1369 = vcvt.s32.f32 %v1337
        %v1370 = vcvt.s32.f32 %v1338
        %v1371 = vcvt.s32.f32 %v1339
        %v1372 = vcvt.s32.f32 %v1340
        %v1373 = vcvt.s32.f32 %v1341
        %v1374 = vcvt.s32.f32 %v1342
        %v1375 = vcvt.s32.f32 %v1343
        %v1376 = vcvt.s32.f32 %v1344
        %v1377 = vcvt.s32.f32 %v1345
        %v1378 = vcvt.s32.f32 %v1346
        %v1379 = vcvt.s32.f32 %v1347
        %v1380 = vcvt.s32.f32 %v1348
        %1381 = vmatprep.subr.mxu0 0.0
        %1382 = vmatpush1.msra.mxu0 %v282
        %1383 = vmatprep.subr.mxu0 0.0
        %1384 = vmatpush1.msra.mxu0 %v283
        %1385 = vmatprep.subr.mxu0 0.0
        %1386 = vmatpush1.msra.mxu0 %v284
        %1387 = vmatprep.subr.mxu0 0.0
        %1388 = vmatpush1.msra.mxu0 %v285
        %1389 = vmatprep.subr.mxu0 0.0
        %1390 = vmatpush1.msra.mxu0 %v286
        %1391 = vmatprep.subr.mxu0 0.0
        %1392 = vmatpush1.msra.mxu0 %v287
        %1393 = vmatprep.subr.mxu0 0.0
        %1394 = vmatpush1.msra.mxu0 %v288
        %1395 = vmatprep.subr.mxu0 0.0
        %1396 = vmatpush1.msra.mxu0 %v289
        %1397 = vmatprep.subr.mxu0 0.0
        %1398 = vmatpush1.msra.mxu0 %v290
        %1399 = vmatprep.subr.mxu0 0.0
        %1400 = vmatpush1.msra.mxu0 %v291
        %1401 = vmatprep.subr.mxu0 0.0
        %1402 = vmatpush1.msra.mxu0 %v292
        %1403 = vmatprep.subr.mxu0 0.0
        %1404 = vmatpush1.msra.mxu0 %v293
        %1405 = vmatprep.subr.mxu0 0.0
        %1406 = vmatpush1.msra.mxu0 %v294
        %1407 = vmatprep.subr.mxu0 0.0
        %1408 = vmatpush1.msra.mxu0 %v295
        %1409 = vmatprep.subr.mxu0 0.0
        %1410 = vmatpush1.msra.mxu0 %v296
        %1411 = vmatprep.subr.mxu0 0.0
        %1412 = vmatpush1.msra.mxu0 %v297
        %1413 = vmatprep.subr.mxu0 0.0
        %1414 = vmatpush1.msra.mxu0 0.0
        %1415 = vmatprep.subr.mxu0 0.0
        %1416 = vmatpush1.msra.mxu0 0.0
        %1417 = vmatprep.subr.mxu0 0.0
        %1418 = vmatpush1.msra.mxu0 0.0
        %1419 = vmatprep.subr.mxu0 0.0
        %1420 = vmatpush1.msra.mxu0 0.0
        %1421 = vmatprep.subr.mxu0 0.0
        %1422 = vmatpush1.msra.mxu0 0.0
        %1423 = vmatprep.subr.mxu0 0.0
        %1424 = vmatpush1.msra.mxu0 0.0
        %1425 = vmatprep.subr.mxu0 0.0
        %1426 = vmatpush1.msra.mxu0 0.0
        %1427 = vmatprep.subr.mxu0 0.0
        %1428 = vmatpush1.msra.mxu0 0.0
        %1429 = vmatprep.subr.mxu0 0.0
        %1430 = vmatpush1.msra.mxu0 0.0
        %1431 = vmatprep.subr.mxu0 0.0
        %1432 = vmatpush1.msra.mxu0 0.0
        %1433 = vmatprep.subr.mxu0 0.0
        %1434 = vmatpush1.msra.mxu0 0.0
        %1435 = vmatprep.subr.mxu0 0.0
        %1436 = vmatpush1.msra.mxu0 0.0
        %1437 = vmatprep.subr.mxu0 0.0
        %1438 = vmatpush1.msra.mxu0 0.0
        %1439 = vmatprep.subr.mxu0 0.0
        %1440 = vmatpush1.msra.mxu0 0.0
        %1441 = vmatprep.subr.mxu0 0.0
        %1442 = vmatpush1.msra.mxu0 0.0
        %1443 = vmatprep.subr.mxu0 0.0
        %1444 = vmatpush1.msra.mxu0 0.0
        %1445 = vmatprep.mubr.f32.mxu0 0.0
        %1446 = vmatmul.mubr.f32.gmra.mrb[0].mxu0 %v1349
        %v1447 = vpop.f32.mrb[0].mxu0
        %v1448 = vadd.f32 0.0, %v1447
        %v1449 = vpop.f32.mrb[0].mxu0
        %1450 = vmatprep.mubr.f32.mxu0 0.0
        %1451 = vmatmul.mubr.f32.gmra.mrb[0].mxu0 %v1350
        %v1452 = vpop.f32.mrb[0].mxu0
        %v1453 = vadd.f32 0.0, %v1452
        %v1454 = vpop.f32.mrb[0].mxu0
        %1455 = vmatprep.mubr.f32.mxu0 0.0
        %1456 = vmatmul.mubr.f32.gmra.mrb[0].mxu0 %v1351
        %v1457 = vpop.f32.mrb[0].mxu0
        %v1458 = vadd.f32 0.0, %v1457
        %v1459 = vpop.f32.mrb[0].mxu0
        %1460 = vmatprep.mubr.f32.mxu0 0.0
        %1461 = vmatmul.mubr.f32.gmra.mrb[0].mxu0 %v1352
        %v1462 = vpop.f32.mrb[0].mxu0
        %v1463 = vadd.f32 0.0, %v1462
        %v1464 = vpop.f32.mrb[0].mxu0
        %1465 = vmatprep.mubr.f32.mxu0 0.0
        %1466 = vmatmul.mubr.f32.gmra.mrb[0].mxu0 %v1353
        %v1467 = vpop.f32.mrb[0].mxu0
        %v1468 = vadd.f32 0.0, %v1467
        %v1469 = vpop.f32.mrb[0].mxu0
        %1470 = vmatprep.mubr.f32.mxu0 0.0
        %1471 = vmatmul.mubr.f32.gmra.mrb[0].mxu0 %v1354
        %v1472 = vpop.f32.mrb[0].mxu0
        %v1473 = vadd.f32 0.0, %v1472
        %v1474 = vpop.f32.mrb[0].mxu0
        %1475 = vmatprep.mubr.f32.mxu0 0.0
        %1476 = vmatmul.mubr.f32.gmra.mrb[0].mxu0 %v1355
        %v1477 = vpop.f32.mrb[0].mxu0
        %v1478 = vadd.f32 0.0, %v1477
        %v1479 = vpop.f32.mrb[0].mxu0
        %1480 = vmatprep.mubr.f32.mxu0 0.0
        %1481 = vmatmul.mubr.f32.gmra.mrb[0].mxu0 %v1356
        %v1482 = vpop.f32.mrb[0].mxu0
        %v1483 = vadd.f32 0.0, %v1482
        %v1484 = vpop.f32.mrb[0].mxu0
        %1485 = vmatprep.mubr.f32.mxu0 0.0
        %1486 = vmatmul.mubr.f32.gmra.mrb[0].mxu0 %v1357
        %v1487 = vpop.f32.mrb[0].mxu0
        %v1488 = vadd.f32 0.0, %v1487
        %v1489 = vpop.f32.mrb[0].mxu0
        %1490 = vmatprep.mubr.f32.mxu0 0.0
        %1491 = vmatmul.mubr.f32.gmra.mrb[0].mxu0 %v1358
        %v1492 = vpop.f32.mrb[0].mxu0
        %v1493 = vadd.f32 0.0, %v1492
        %v1494 = vpop.f32.mrb[0].mxu0
        %1495 = vmatprep.mubr.f32.mxu0 0.0
        %1496 = vmatmul.mubr.f32.gmra.mrb[0].mxu0 %v1359
        %v1497 = vpop.f32.mrb[0].mxu0
        %v1498 = vadd.f32 0.0, %v1497
        %v1499 = vpop.f32.mrb[0].mxu0
        %1500 = vmatprep.mubr.f32.mxu0 0.0
        %1501 = vmatmul.mubr.f32.gmra.mrb[0].mxu0 %v1360
        %v1502 = vpop.f32.mrb[0].mxu0
        %v1503 = vadd.f32 0.0, %v1502
        %v1504 = vpop.f32.mrb[0].mxu0
        %1505 = vmatprep.mubr.f32.mxu0 0.0
        %1506 = vmatmul.mubr.f32.gmra.mrb[0].mxu0 %v1361
        %v1507 = vpop.f32.mrb[0].mxu0
        %v1508 = vadd.f32 0.0, %v1507
        %v1509 = vpop.f32.mrb[0].mxu0
        %1510 = vmatprep.mubr.f32.mxu0 0.0
        %1511 = vmatmul.mubr.f32.gmra.mrb[0].mxu0 %v1362
        %v1512 = vpop.f32.mrb[0].mxu0
        %v1513 = vadd.f32 0.0, %v1512
        %v1514 = vpop.f32.mrb[0].mxu0
        %1515 = vmatprep.mubr.f32.mxu0 0.0
        %1516 = vmatmul.mubr.f32.gmra.mrb[0].mxu0 %v1363
        %v1517 = vpop.f32.mrb[0].mxu0
        %v1518 = vadd.f32 0.0, %v1517
        %v1519 = vpop.f32.mrb[0].mxu0
        %1520 = vmatprep.mubr.f32.mxu0 0.0
        %1521 = vmatmul.mubr.f32.gmra.mrb[0].mxu0 %v1364
        %v1522 = vpop.f32.mrb[0].mxu0
        %v1523 = vadd.f32 0.0, %v1522
        %v1524 = vpop.f32.mrb[0].mxu0
        %1525 = vmatprep.mubr.f32.mxu0 0.0
        %1526 = vmatmul.mubr.f32.gmra.mrb[0].mxu0 %v1365
        %v1527 = vpop.f32.mrb[0].mxu0
        %v1528 = vadd.f32 0.0, %v1527
        %v1529 = vpop.f32.mrb[0].mxu0
        %1530 = vmatprep.mubr.f32.mxu0 0.0
        %1531 = vmatmul.mubr.f32.gmra.mrb[0].mxu0 %v1366
        %v1532 = vpop.f32.mrb[0].mxu0
        %v1533 = vadd.f32 0.0, %v1532
        %v1534 = vpop.f32.mrb[0].mxu0
        %1535 = vmatprep.mubr.f32.mxu0 0.0
        %1536 = vmatmul.mubr.f32.gmra.mrb[0].mxu0 %v1367
        %v1537 = vpop.f32.mrb[0].mxu0
        %v1538 = vadd.f32 0.0, %v1537
        %v1539 = vpop.f32.mrb[0].mxu0
        %1540 = vmatprep.mubr.f32.mxu0 0.0
        %1541 = vmatmul.mubr.f32.gmra.mrb[0].mxu0 %v1368
        %v1542 = vpop.f32.mrb[0].mxu0
        %v1543 = vadd.f32 0.0, %v1542
        %v1544 = vpop.f32.mrb[0].mxu0
        %1545 = vmatprep.mubr.f32.mxu0 0.0
        %1546 = vmatmul.mubr.f32.gmra.mrb[0].mxu0 %v1369
        %v1547 = vpop.f32.mrb[0].mxu0
        %v1548 = vadd.f32 0.0, %v1547
        %v1549 = vpop.f32.mrb[0].mxu0
        %1550 = vmatprep.mubr.f32.mxu0 0.0
        %1551 = vmatmul.mubr.f32.gmra.mrb[0].mxu0 %v1370
        %v1552 = vpop.f32.mrb[0].mxu0
        %v1553 = vadd.f32 0.0, %v1552
        %v1554 = vpop.f32.mrb[0].mxu0
        %1555 = vmatprep.mubr.f32.mxu0 0.0
        %1556 = vmatmul.mubr.f32.gmra.mrb[0].mxu0 %v1371
        %v1557 = vpop.f32.mrb[0].mxu0
        %v1558 = vadd.f32 0.0, %v1557
        %v1559 = vpop.f32.mrb[0].mxu0
        %1560 = vmatprep.mubr.f32.mxu0 0.0
        %1561 = vmatmul.mubr.f32.gmra.mrb[0].mxu0 %v1372
        %v1562 = vpop.f32.mrb[0].mxu0
        %v1563 = vadd.f32 0.0, %v1562
        %v1564 = vpop.f32.mrb[0].mxu0
        %1565 = vmatprep.mubr.f32.mxu0 0.0
        %1566 = vmatmul.mubr.f32.gmra.mrb[0].mxu0 %v1373
        %v1567 = vpop.f32.mrb[0].mxu0
        %v1568 = vadd.f32 0.0, %v1567
        %v1569 = vpop.f32.mrb[0].mxu0
        %1570 = vmatprep.mubr.f32.mxu0 0.0
        %1571 = vmatmul.mubr.f32.gmra.mrb[0].mxu0 %v1374
        %v1572 = vpop.f32.mrb[0].mxu0
        %v1573 = vadd.f32 0.0, %v1572
        %v1574 = vpop.f32.mrb[0].mxu0
        %1575 = vmatprep.mubr.f32.mxu0 0.0
        %1576 = vmatmul.mubr.f32.gmra.mrb[0].mxu0 %v1375
        %v1577 = vpop.f32.mrb[0].mxu0
        %v1578 = vadd.f32 0.0, %v1577
        %v1579 = vpop.f32.mrb[0].mxu0
        %1580 = vmatprep.mubr.f32.mxu0 0.0
        %1581 = vmatmul.mubr.f32.gmra.mrb[0].mxu0 %v1376
        %v1582 = vpop.f32.mrb[0].mxu0
        %v1583 = vadd.f32 0.0, %v1582
        %v1584 = vpop.f32.mrb[0].mxu0
        %1585 = vmatprep.mubr.f32.mxu0 0.0
        %1586 = vmatmul.mubr.f32.gmra.mrb[0].mxu0 %v1377
        %v1587 = vpop.f32.mrb[0].mxu0
        %v1588 = vadd.f32 0.0, %v1587
        %v1589 = vpop.f32.mrb[0].mxu0
        %1590 = vmatprep.mubr.f32.mxu0 0.0
        %1591 = vmatmul.mubr.f32.gmra.mrb[0].mxu0 %v1378
        %v1592 = vpop.f32.mrb[0].mxu0
        %v1593 = vadd.f32 0.0, %v1592
        %v1594 = vpop.f32.mrb[0].mxu0
        %1595 = vmatprep.mubr.f32.mxu0 0.0
        %1596 = vmatmul.mubr.f32.gmra.mrb[0].mxu0 %v1379
        %v1597 = vpop.f32.mrb[0].mxu0
        %v1598 = vadd.f32 0.0, %v1597
        %v1599 = vpop.f32.mrb[0].mxu0
        %1600 = vmatprep.mubr.f32.mxu0 0.0
        %1601 = vmatmul.mubr.f32.gmra.mrb[0].mxu0 %v1380
        %v1602 = vpop.f32.mrb[0].mxu0
        %v1603 = vadd.f32 0.0, %v1602
        %v1604 = vpop.f32.mrb[0].mxu0
        %1605 = vdwg.mxu0
        %1606 = vst.msk [vmem:[%s247] sm:$0xff] %vm298, %v1448
        %1607 = vst.msk [vmem:[%s247 + $0x8] sm:$0xff] %vm298, %v1453
        %1608 = vst.msk [vmem:[%s247 + $0x10] sm:$0xff] %vm298, %v1458
        %1609 = vst.msk [vmem:[%s247 + $0x18] sm:$0xff] %vm298, %v1463
        %1610 = vst.msk [vmem:[%s247 + $0x20] sm:$0xff] %vm298, %v1468
        %1611 = vst.msk [vmem:[%s247 + $0x28] sm:$0xff] %vm298, %v1473
        %1612 = vst.msk [vmem:[%s247 + $0x30] sm:$0xff] %vm298, %v1478
        %1613 = vst.msk [vmem:[%s247 + $0x38] sm:$0xff] %vm298, %v1483
        %1614 = vst.msk [vmem:[%s247 + $0x40] sm:$0xff] %vm298, %v1488
        %1615 = vst.msk [vmem:[%s247 + $0x48] sm:$0xff] %vm298, %v1493
        %1616 = vst.msk [vmem:[%s247 + $0x50] sm:$0xff] %vm298, %v1498
        %1617 = vst.msk [vmem:[%s247 + $0x58] sm:$0xff] %vm298, %v1503
        %1618 = vst.msk [vmem:[%s247 + $0x60] sm:$0xff] %vm298, %v1508
        %1619 = vst.msk [vmem:[%s247 + $0x68] sm:$0xff] %vm298, %v1513
        %1620 = vst.msk [vmem:[%s247 + $0x70] sm:$0xff] %vm298, %v1518
        %1621 = vst.msk [vmem:[%s247 + $0x78] sm:$0xff] %vm298, %v1523
        %1622 = vst.msk [vmem:[%s247 + $0x80] sm:$0xff] %vm298, %v1528
        %1623 = vst.msk [vmem:[%s247 + $0x88] sm:$0xff] %vm298, %v1533
        %1624 = vst.msk [vmem:[%s247 + $0x90] sm:$0xff] %vm298, %v1538
        %1625 = vst.msk [vmem:[%s247 + $0x98] sm:$0xff] %vm298, %v1543
        %1626 = vst.msk [vmem:[%s247 + $0xa0] sm:$0xff] %vm298, %v1548
        %1627 = vst.msk [vmem:[%s247 + $0xa8] sm:$0xff] %vm298, %v1553
        %1628 = vst.msk [vmem:[%s247 + $0xb0] sm:$0xff] %vm298, %v1558
        %1629 = vst.msk [vmem:[%s247 + $0xb8] sm:$0xff] %vm298, %v1563
        %1630 = vst.msk [vmem:[%s247 + $0xc0] sm:$0xff] %vm298, %v1568
        %1631 = vst.msk [vmem:[%s247 + $0xc8] sm:$0xff] %vm298, %v1573
        %1632 = vst.msk [vmem:[%s247 + $0xd0] sm:$0xff] %vm298, %v1578
        %1633 = vst.msk [vmem:[%s247 + $0xd8] sm:$0xff] %vm298, %v1583
        %1634 = vst.msk [vmem:[%s247 + $0xe0] sm:$0xff] %vm298, %v1588
        %1635 = vst.msk [vmem:[%s247 + $0xe8] sm:$0xff] %vm298, %v1593
        %1636 = vst.msk [vmem:[%s247 + $0xf0] sm:$0xff] %vm298, %v1598
        %1637 = vst.msk [vmem:[%s247 + $0xf8] sm:$0xff] %vm298, %v1603
        %v1638 = vpack.c.bf16 %v1350, %v1349
        %v1639 = vpack.c.bf16 %v1352, %v1351
        %v1640 = vpack.c.bf16 %v1354, %v1353
        %v1641 = vpack.c.bf16 %v1356, %v1355
        %v1642 = vpack.c.bf16 %v1358, %v1357
        %v1643 = vpack.c.bf16 %v1360, %v1359
        %v1644 = vpack.c.bf16 %v1362, %v1361
        %v1645 = vpack.c.bf16 %v1364, %v1363
        %v1646 = vpack.c.bf16 %v1366, %v1365
        %v1647 = vpack.c.bf16 %v1368, %v1367
        %v1648 = vpack.c.bf16 %v1370, %v1369
        %v1649 = vpack.c.bf16 %v1372, %v1371
        %v1650 = vpack.c.bf16 %v1374, %v1373
        %v1651 = vpack.c.bf16 %v1376, %v1375
        %v1652 = vpack.c.bf16 %v1378, %v1377
        %v1653 = vpack.c.bf16 %v1380, %v1379
        %v1670 = vunpack.c.l.b16 %v1638
        %v1671 = vunpack.c.h.b16 %v1638
        %v1672 = vunpack.c.l.b16 %v1639
        %v1673 = vunpack.c.h.b16 %v1639
        %v1674 = vunpack.c.l.b16 %v1640
        %v1675 = vunpack.c.h.b16 %v1640
        %v1676 = vunpack.c.l.b16 %v1641
        %v1677 = vunpack.c.h.b16 %v1641
        %v1678 = vunpack.c.l.b16 %v1642
        %v1679 = vunpack.c.h.b16 %v1642
        %v1680 = vunpack.c.l.b16 %v1643
        %v1681 = vunpack.c.h.b16 %v1643
        %v1682 = vunpack.c.l.b16 %v1644
        %v1683 = vunpack.c.h.b16 %v1644
        %v1684 = vunpack.c.l.b16 %v1645
        %v1685 = vunpack.c.h.b16 %v1645
        %v1686 = vunpack.c.l.b16 %v1646
        %v1687 = vunpack.c.h.b16 %v1646
        %v1688 = vunpack.c.l.b16 %v1647
        %v1689 = vunpack.c.h.b16 %v1647
        %v1690 = vunpack.c.l.b16 %v1648
        %v1691 = vunpack.c.h.b16 %v1648
        %v1692 = vunpack.c.l.b16 %v1649
        %v1693 = vunpack.c.h.b16 %v1649
        %v1694 = vunpack.c.l.b16 %v1650
        %v1695 = vunpack.c.h.b16 %v1650
        %v1696 = vunpack.c.l.b16 %v1651
        %v1697 = vunpack.c.h.b16 %v1651
        %v1698 = vunpack.c.l.b16 %v1652
        %v1699 = vunpack.c.h.b16 %v1652
        %v1700 = vunpack.c.l.b16 %v1653
        %v1701 = vunpack.c.h.b16 %v1653
        %v1702 = vpack.c.b16 %v1670, %v1670
        %v1703 = vpack.c.b16 %v1671, %v1671
        %v1704 = vpack.c.b16 %v1672, %v1672
        %v1705 = vpack.c.b16 %v1673, %v1673
        %v1706 = vpack.c.b16 %v1674, %v1674
        %v1707 = vpack.c.b16 %v1675, %v1675
        %v1708 = vpack.c.b16 %v1676, %v1676
        %v1709 = vpack.c.b16 %v1677, %v1677
        %v1710 = vpack.c.b16 %v1678, %v1678
        %v1711 = vpack.c.b16 %v1679, %v1679
        %v1712 = vpack.c.b16 %v1680, %v1680
        %v1713 = vpack.c.b16 %v1681, %v1681
        %v1714 = vpack.c.b16 %v1682, %v1682
        %v1715 = vpack.c.b16 %v1683, %v1683
        %v1716 = vpack.c.b16 %v1684, %v1684
        %v1717 = vpack.c.b16 %v1685, %v1685
        %v1718 = vpack.c.b16 %v1686, %v1686
        %v1719 = vpack.c.b16 %v1687, %v1687
        %v1720 = vpack.c.b16 %v1688, %v1688
        %v1721 = vpack.c.b16 %v1689, %v1689
        %v1722 = vpack.c.b16 %v1690, %v1690
        %v1723 = vpack.c.b16 %v1691, %v1691
        %v1724 = vpack.c.b16 %v1692, %v1692
        %v1725 = vpack.c.b16 %v1693, %v1693
        %v1726 = vpack.c.b16 %v1694, %v1694
        %v1727 = vpack.c.b16 %v1695, %v1695
        %v1728 = vpack.c.b16 %v1696, %v1696
        %v1729 = vpack.c.b16 %v1697, %v1697
        %v1730 = vpack.c.b16 %v1698, %v1698
        %v1731 = vpack.c.b16 %v1699, %v1699
        %v1732 = vpack.c.b16 %v1700, %v1700
        %v1733 = vpack.c.b16 %v1701, %v1701
        %1766 = vst [vmem:[%s229] sm:$0xf] %v1702
        %1767 = vst [vmem:[%s229 + $0x4] sm:$0xf] %v1703
        %1768 = vst [vmem:[%s229 + $0x8] sm:$0xf] %v1704
        %1769 = vst [vmem:[%s229 + $0xc] sm:$0xf] %v1705
        %1770 = vst [vmem:[%s229 + $0x10] sm:$0xf] %v1706
        %1771 = vst [vmem:[%s229 + $0x14] sm:$0xf] %v1707
        %1772 = vst [vmem:[%s229 + $0x18] sm:$0xf] %v1708
        %1773 = vst [vmem:[%s229 + $0x1c] sm:$0xf] %v1709
        %1774 = vst [vmem:[%s229 + $0x20] sm:$0xf] %v1710
        %1775 = vst [vmem:[%s229 + $0x24] sm:$0xf] %v1711
        %1776 = vst [vmem:[%s229 + $0x28] sm:$0xf] %v1712
        %1777 = vst [vmem:[%s229 + $0x2c] sm:$0xf] %v1713
        %1778 = vst [vmem:[%s229 + $0x30] sm:$0xf] %v1714
        %1779 = vst [vmem:[%s229 + $0x34] sm:$0xf] %v1715
        %1780 = vst [vmem:[%s229 + $0x38] sm:$0xf] %v1716
        %1781 = vst [vmem:[%s229 + $0x3c] sm:$0xf] %v1717
        %1782 = vst [vmem:[%s229 + $0x40] sm:$0xf] %v1718
        %1783 = vst [vmem:[%s229 + $0x44] sm:$0xf] %v1719
        %1784 = vst [vmem:[%s229 + $0x48] sm:$0xf] %v1720
        %1785 = vst [vmem:[%s229 + $0x4c] sm:$0xf] %v1721
        %1786 = vst [vmem:[%s229 + $0x50] sm:$0xf] %v1722
        %1787 = vst [vmem:[%s229 + $0x54] sm:$0xf] %v1723
        %1788 = vst [vmem:[%s229 + $0x58] sm:$0xf] %v1724
        %1789 = vst [vmem:[%s229 + $0x5c] sm:$0xf] %v1725
        %1790 = vst [vmem:[%s229 + $0x60] sm:$0xf] %v1726
        %1791 = vst [vmem:[%s229 + $0x64] sm:$0xf] %v1727
        %1792 = vst [vmem:[%s229 + $0x68] sm:$0xf] %v1728
        %1793 = vst [vmem:[%s229 + $0x6c] sm:$0xf] %v1729
        %1794 = vst [vmem:[%s229 + $0x70] sm:$0xf] %v1730
        %1795 = vst [vmem:[%s229 + $0x74] sm:$0xf] %v1731
        %1796 = vst [vmem:[%s229 + $0x78] sm:$0xf] %v1732
        %1797 = vst [vmem:[%s229 + $0x7c] sm:$0xf] %v1733
        %v1798 = vsub.f32 %v1448, %v250
        %v1799 = vsub.f32 %v1453, %v251
        %v1800 = vsub.f32 %v1458, %v252
        %v1801 = vsub.f32 %v1463, %v253
        %v1802 = vsub.f32 %v1468, %v254
        %v1803 = vsub.f32 %v1473, %v255
        %v1804 = vsub.f32 %v1478, %v256
        %v1805 = vsub.f32 %v1483, %v257
        %v1806 = vsub.f32 %v1488, %v258
        %v1807 = vsub.f32 %v1493, %v259
        %v1808 = vsub.f32 %v1498, %v260
        %v1809 = vsub.f32 %v1503, %v261
        %v1810 = vsub.f32 %v1508, %v262
        %v1811 = vsub.f32 %v1513, %v263
        %v1812 = vsub.f32 %v1518, %v264
        %v1813 = vsub.f32 %v1523, %v265
        %v1814 = vsub.f32 %v1528, %v266
        %v1815 = vsub.f32 %v1533, %v267
        %v1816 = vsub.f32 %v1538, %v268
        %v1817 = vsub.f32 %v1543, %v269
        %v1818 = vsub.f32 %v1548, %v270
        %v1819 = vsub.f32 %v1553, %v271
        %v1820 = vsub.f32 %v1558, %v272
        %v1821 = vsub.f32 %v1563, %v273
        %v1822 = vsub.f32 %v1568, %v274
        %v1823 = vsub.f32 %v1573, %v275
        %v1824 = vsub.f32 %v1578, %v276
        %v1825 = vsub.f32 %v1583, %v277
        %v1826 = vsub.f32 %v1588, %v278
        %v1827 = vsub.f32 %v1593, %v279
        %v1828 = vsub.f32 %v1598, %v280
        %v1829 = vsub.f32 %v1603, %v281
        %v1830 = vadd.f32 %v1349, %v1350
        %v1831 = vadd.f32 %v1830, %v1351
        %v1832 = vadd.f32 %v1831, %v1352
        %v1833 = vadd.f32 %v1832, %v1353
        %v1834 = vadd.f32 %v1833, %v1354
        %v1835 = vadd.f32 %v1834, %v1355
        %v1836 = vadd.f32 %v1835, %v1356
        %v1837 = vadd.f32 %v1836, %v1357
        %v1838 = vadd.f32 %v1837, %v1358
        %v1839 = vadd.f32 %v1838, %v1359
        %v1840 = vadd.f32 %v1839, %v1360
        %v1841 = vadd.f32 %v1840, %v1361
        %v1842 = vadd.f32 %v1841, %v1362
        %v1843 = vadd.f32 %v1842, %v1363
        %v1844 = vadd.f32 %v1843, %v1364
        %v1845 = vadd.f32 %v1844, %v1365
        %v1846 = vadd.f32 %v1845, %v1366
        %v1847 = vadd.f32 %v1846, %v1367
        %v1848 = vadd.f32 %v1847, %v1368
        %v1849 = vadd.f32 %v1848, %v1369
        %v1850 = vadd.f32 %v1849, %v1370
        %v1851 = vadd.f32 %v1850, %v1371
        %v1852 = vadd.f32 %v1851, %v1372
        %v1853 = vadd.f32 %v1852, %v1373
        %v1854 = vadd.f32 %v1853, %v1374
        %v1855 = vadd.f32 %v1854, %v1375
        %v1856 = vadd.f32 %v1855, %v1376
        %v1857 = vadd.f32 %v1856, %v1377
        %v1858 = vadd.f32 %v1857, %v1378
        %v1859 = vadd.f32 %v1858, %v1379
        %v1860 = vadd.f32 %v1859, %v1380
        %v1861 = vrot.slane %v1860, 4
        %v1862 = vadd.f32 %v1860, %v1861
        %v1863 = vrot.slane %v1862, 2
        %v1864 = vadd.f32 %v1862, %v1863
        %v1865 = vrot.slane %v1864, 1
        %v1866 = vadd.f32 %v1864, %v1865
        %v1867 = vmul.f32 %v1798, %v1798
        %v1868 = vmul.f32 %v1799, %v1799
        %v1869 = vmul.f32 %v1800, %v1800
        %v1870 = vmul.f32 %v1801, %v1801
        %v1871 = vmul.f32 %v1802, %v1802
        %v1872 = vmul.f32 %v1803, %v1803
        %v1873 = vmul.f32 %v1804, %v1804
        %v1874 = vmul.f32 %v1805, %v1805
        %v1875 = vmul.f32 %v1806, %v1806
        %v1876 = vmul.f32 %v1807, %v1807
        %v1877 = vmul.f32 %v1808, %v1808
        %v1878 = vmul.f32 %v1809, %v1809
        %v1879 = vmul.f32 %v1810, %v1810
        %v1880 = vmul.f32 %v1811, %v1811
        %v1881 = vmul.f32 %v1812, %v1812
        %v1882 = vmul.f32 %v1813, %v1813
        %v1883 = vmul.f32 %v1814, %v1814
        %v1884 = vmul.f32 %v1815, %v1815
        %v1885 = vmul.f32 %v1816, %v1816
        %v1886 = vmul.f32 %v1817, %v1817
        %v1887 = vmul.f32 %v1818, %v1818
        %v1888 = vmul.f32 %v1819, %v1819
        %v1889 = vmul.f32 %v1820, %v1820
        %v1890 = vmul.f32 %v1821, %v1821
        %v1891 = vmul.f32 %v1822, %v1822
        %v1892 = vmul.f32 %v1823, %v1823
        %v1893 = vmul.f32 %v1824, %v1824
        %v1894 = vmul.f32 %v1825, %v1825
        %v1895 = vmul.f32 %v1826, %v1826
        %v1896 = vmul.f32 %v1827, %v1827
        %v1897 = vmul.f32 %v1828, %v1828
        %v1898 = vmul.f32 %v1829, %v1829
        %v1899 = vsel %vm298, %v1867, 0.0
        %v1900 = vsel %vm298, %v1868, 0.0
        %v1901 = vadd.f32 %v1899, %v1900
        %v1902 = vsel %vm298, %v1869, 0.0
        %v1903 = vadd.f32 %v1901, %v1902
        %v1904 = vsel %vm298, %v1870, 0.0
        %v1905 = vadd.f32 %v1903, %v1904
        %v1906 = vsel %vm298, %v1871, 0.0
        %v1907 = vadd.f32 %v1905, %v1906
        %v1908 = vsel %vm298, %v1872, 0.0
        %v1909 = vadd.f32 %v1907, %v1908
        %v1910 = vsel %vm298, %v1873, 0.0
        %v1911 = vadd.f32 %v1909, %v1910
        %v1912 = vsel %vm298, %v1874, 0.0
        %v1913 = vadd.f32 %v1911, %v1912
        %v1914 = vsel %vm298, %v1875, 0.0
        %v1915 = vadd.f32 %v1913, %v1914
        %v1916 = vsel %vm298, %v1876, 0.0
        %v1917 = vadd.f32 %v1915, %v1916
        %v1918 = vsel %vm298, %v1877, 0.0
        %v1919 = vadd.f32 %v1917, %v1918
        %v1920 = vsel %vm298, %v1878, 0.0
        %v1921 = vadd.f32 %v1919, %v1920
        %v1922 = vsel %vm298, %v1879, 0.0
        %v1923 = vadd.f32 %v1921, %v1922
        %v1924 = vsel %vm298, %v1880, 0.0
        %v1925 = vadd.f32 %v1923, %v1924
        %v1926 = vsel %vm298, %v1881, 0.0
        %v1927 = vadd.f32 %v1925, %v1926
        %v1928 = vsel %vm298, %v1882, 0.0
        %v1929 = vadd.f32 %v1927, %v1928
        %v1930 = vsel %vm298, %v1883, 0.0
        %v1931 = vadd.f32 %v1929, %v1930
        %v1932 = vsel %vm298, %v1884, 0.0
        %v1933 = vadd.f32 %v1931, %v1932
        %v1934 = vsel %vm298, %v1885, 0.0
        %v1935 = vadd.f32 %v1933, %v1934
        %v1936 = vsel %vm298, %v1886, 0.0
        %v1937 = vadd.f32 %v1935, %v1936
        %v1938 = vsel %vm298, %v1887, 0.0
        %v1939 = vadd.f32 %v1937, %v1938
        %v1940 = vsel %vm298, %v1888, 0.0
        %v1941 = vadd.f32 %v1939, %v1940
        %v1942 = vsel %vm298, %v1889, 0.0
        %v1943 = vadd.f32 %v1941, %v1942
        %v1944 = vsel %vm298, %v1890, 0.0
        %v1945 = vadd.f32 %v1943, %v1944
        %v1946 = vsel %vm298, %v1891, 0.0
        %v1947 = vadd.f32 %v1945, %v1946
        %v1948 = vsel %vm298, %v1892, 0.0
        %v1949 = vadd.f32 %v1947, %v1948
        %v1950 = vsel %vm298, %v1893, 0.0
        %v1951 = vadd.f32 %v1949, %v1950
        %v1952 = vsel %vm298, %v1894, 0.0
        %v1953 = vadd.f32 %v1951, %v1952
        %v1954 = vsel %vm298, %v1895, 0.0
        %v1955 = vadd.f32 %v1953, %v1954
        %v1956 = vsel %vm298, %v1896, 0.0
        %v1957 = vadd.f32 %v1955, %v1956
        %v1958 = vsel %vm298, %v1897, 0.0
        %v1959 = vadd.f32 %v1957, %v1958
        %v1960 = vsel %vm298, %v1898, 0.0
        %v1961 = vadd.f32 %v1959, %v1960
        %1962 = vadd.xlane.f32.xlu0 %v1961
        %v1963 = vpop.xlane.xlu0 %1962
        %v1964 = vrot.slane %v1963, 4
        %v1965 = vadd.f32 %v1963, %v1964
        %v1966 = vrot.slane %v1965, 2
        %v1967 = vadd.f32 %v1965, %v1966
        %v1968 = vrot.slane %v1967, 1
        %v1969 = vadd.f32 %v1967, %v1968
        %s1970 = vtos %v1969
        %v1971 = vstv %s1970
        %vm1972 = vcmask 1040384
        %v1973 = vsel %vm1972, %v1866, %v1971
        %1974 = vst [vmem:[%s236] sm:$0x3] %v1973
        %s1975 = smul.u32 32, %s23
        %p1976 = scmp.lt.s32.totalorder %s1975, 63
        %s1977 = scalar_select %p1976, %s1975, 63
        %s1978 = smul.addr %s1977, 8
        %s1979 = scalar_lea.vmem %s3, %s1978
        %s1980 = sand.u32 %s125, 1
        %s1981 = scalar_lea.sflag [#allocation3], %s1980
        %s1982 = sand.u32 %s125, 1
        %s1983 = smul.addr %s1982, 128
        %s1984 = scalar_lea.vmem [#allocation2], %s1983
        %s1985 = sand.u32 %s151, 1
        %s1986 = scalar_lea.sflag [#allocation5], %s1985
        %s1987 = sand.u32 %s151, 1
        %s1988 = smul.addr %s1987, 2
        %s1989 = scalar_lea.vmem [#allocation4], %s1988
        // Predicated region
        $region33: #{tpu_custom_call.1} parent=31 // pred_check
          %p1990 = pneg %p109
        $region34: #{tpu_custom_call.1} parent=31 // pred_check_branch
          %1992 = sbr.rel (%p1990) target = $region36
        $region35: #{tpu_custom_call.1} parent=31 // pred_region
          %s1993 = smul.u32 32, %s23
        $region36: #{tpu_custom_call.1} parent=31 // pred_fallthru
          _
        // Predicated region
        $region37: #{tpu_custom_call.1} parent=31 // pred_check
          %p1994 = pneg %p135
        $region38: #{tpu_custom_call.1} parent=31 // pred_check_branch
          %1996 = sbr.rel (%p1994) target = $region40
        $region39: #{tpu_custom_call.1} parent=31 // pred_region
          %s1997 = smul.u32 32, %s23
          %s1999 = ssub.s32 2048, 2048
          %2000 = vsyncadd %s1981, %s1999
          %s2001 = smul.addr %s1997, 64
          %s2002 = scalar_lea.hbm %s4, %s2001
          %s2003 = sshll.u32 %s1984, 4
          %s2004 = int_to_ptr.vmem [resolvable:$true] %s2003
          %2009 = dma.vmem_to_hbm [thread:$0]  %s2004, 2048, %s2002, %s1981, 64, 64, 4
        $region40: #{tpu_custom_call.1} parent=31 // pred_fallthru
          _
        // Predicated region
        $region41: #{tpu_custom_call.1} parent=31 // pred_check
          %p2010 = pneg %p161
        $region42: #{tpu_custom_call.1} parent=31 // pred_check_branch
          %2012 = sbr.rel (%p2010) target = $region44
        $region43: #{tpu_custom_call.1} parent=31 // pred_region
          %s2014 = ssub.s32 32, 32
          %2015 = vsyncadd %s1986, %s2014
          %s2016 = smul.addr %s23, 32
          %s2017 = scalar_lea.hbm %s5, %s2016
          %s2019 = sshll.u32 %s1989, 4
          %s2020 = int_to_ptr.vmem [resolvable:$true] %s2019
          %2022 = dma.vmem_to_hbm [thread:$0]  %s2020, 32, %s2017, %s1986
        $region44: #{tpu_custom_call.1} parent=31 // pred_fallthru
          _
      $region32: #{tpu_custom_call.1} parent=5 // pred_fallthru
        _
      %p2023 = scmp.le.s32.totalorder 2, %s18
      // Predicated region
      $region45: #{tpu_custom_call.1} parent=5 // pred_check
        %p2024 = pneg %p2023
      $region46: #{tpu_custom_call.1} parent=5 // pred_check_branch
        %2026 = sbr.rel (%p2024) target = $region48
      $region47: #{tpu_custom_call.1} parent=5 // pred_region
        %s2027 = ssub.s32 %s18, 2
        // Predicated region
        $region49: #{tpu_custom_call.1} parent=47 // pred_check
          %p2028 = pneg %p115
        $region50: #{tpu_custom_call.1} parent=47 // pred_check_branch
          %2030 = sbr.rel (%p2028) target = $region52
        $region51: #{tpu_custom_call.1} parent=47 // pred_region
          %s2031 = smul.u32 32, %s24
          %p2032 = scmp.lt.s32.totalorder %s2031, 63
          %s2033 = scalar_select %p2032, %s2031, 63
          %s2034 = smul.addr %s2033, 8
          %s2035 = scalar_lea.vmem %s3, %s2034
        $region52: #{tpu_custom_call.1} parent=47 // pred_fallthru
          _
        // Predicated region
        $region53: #{tpu_custom_call.1} parent=47 // pred_check
          %p2036 = pneg %p141
        $region54: #{tpu_custom_call.1} parent=47 // pred_check_branch
          %2038 = sbr.rel (%p2036) target = $region56
        $region55: #{tpu_custom_call.1} parent=47 // pred_region
          %s2039 = sand.u32 %s126, 1
          %s2040 = scalar_lea.sflag [#allocation3], %s2039
          %s2041 = sand.u32 %s126, 1
          %s2042 = smul.addr %s2041, 128
          %s2043 = scalar_lea.vmem [#allocation2], %s2042
          %2044 = dma.done %s2040, 2048
        $region56: #{tpu_custom_call.1} parent=47 // pred_fallthru
          _
        // Predicated region
        $region57: #{tpu_custom_call.1} parent=47 // pred_check
          %p2045 = pneg %p167
        $region58: #{tpu_custom_call.1} parent=47 // pred_check_branch
          %2047 = sbr.rel (%p2045) target = $region60
        $region59: #{tpu_custom_call.1} parent=47 // pred_region
          %s2048 = sand.u32 %s152, 1
          %s2049 = scalar_lea.sflag [#allocation5], %s2048
          %s2050 = sand.u32 %s152, 1
          %s2051 = smul.addr %s2050, 2
          %s2052 = scalar_lea.vmem [#allocation4], %s2051
          %2053 = dma.done %s2049, 32
        $region60: #{tpu_custom_call.1} parent=47 // pred_fallthru
          _
      $region48: #{tpu_custom_call.1} parent=5 // pred_fallthru
        _
    $region6: #{tpu_custom_call.1} parent=1 // loop_footer
      %s22 = sadd.s32 1, %s18
    $region7: #{tpu_custom_call.1} parent=1 // loop_footer_branch
      %17 = sbr.rel target = $region3
    $region8: #{tpu_custom_call.1} parent=1 // loop_exit
      _
    %2054 = vsyncpa [#allocation3], 1
    %s2055 = scalar_lea.sflag [#allocation3], 1
    %2056 = vsyncpa %s2055, 1
    %2057 = vsyncpa [#allocation5], 1
    %s2058 = scalar_lea.sflag [#allocation5], 1
    %2059 = vsyncpa %s2058, 1

</llo_original>
